<compile_context>
chip_gen: v7x
topology: tpu7x:2x2x1
jax: 0.10.0
libtpu: 0.0.40
codegen_flags: <defaults>
</compile_context>

<pallas_src>
import functools

import jax
import jax.numpy as jnp
import numpy as np
from jax import lax
from jax.experimental import pallas as pl
from jax.experimental.pallas import tpu as pltpu


def _res_block_kernel(x_ref, w1_ref, w2_ref, o_ref, *, Cp, H, W):
    HW = H * W
    eps = 1e-5
    inv_hw = 1.0 / HW

    # Boundary masks over the flattened spatial (lane) axis; index = h*W + w.
    # Built once at full tile shape (no per-use re-broadcast).
    lane = lax.broadcasted_iota(jnp.int32, (Cp, HW), 1)
    row0 = lane < W                      # h == 0
    rowL = lane >= (H - 1) * W           # h == H-1
    col0 = (lane % W) == 0               # w == 0
    colL = (lane % W) == (W - 1)         # w == W-1

    def roll(x, s):
        # result[p] = x[(p - s) mod HW]; normalize shift to [0, HW).
        return pltpu.roll(x, shift=s % HW, axis=1)

    def conv3x3(x2d, w_taps):
        # x2d: (Cp, HW); w_taps: (9, Cp, Cp).  Reflect-padded 3x3 conv as nine
        # per-tap MXU matmuls accumulated in f32.  Rolls are shared between
        # the +/-1 shifts of each axis.
        x_up = roll(x2d, W)              # value of row h-1 at position (h, w)
        x_dn = roll(x2d, -W)             # value of row h+1 at position (h, w)
        rows = (
            jnp.where(row0, x_dn, x_up),   # dh = -1  (reflect at h == 0)
            x2d,                           # dh =  0
            jnp.where(rowL, x_up, x_dn),   # dh = +1  (reflect at h == H-1)
        )
        acc = jnp.zeros((Cp, HW), jnp.float32)
        t = 0
        for r in rows:
            r_l = roll(r, 1)             # value of col w-1
            r_r = roll(r, -1)            # value of col w+1
            cols = (
                jnp.where(col0, r_r, r_l),   # dw = -1
                r,                           # dw =  0
                jnp.where(colL, r_l, r_r),   # dw = +1
            )
            for p in cols:
                acc = acc + jnp.dot(w_taps[t], p,
                                    preferred_element_type=jnp.float32)
                t += 1
        return acc

    def inst_norm(y):
        # Fused mean / variance: one pass, var = E[y^2] - mean^2 (clamped).
        s = jnp.sum(y, axis=1, keepdims=True)
        s2 = jnp.sum(y * y, axis=1, keepdims=True)
        mean = s * inv_hw
        var = jnp.maximum(s2 * inv_hw - mean * mean, 0.0)
        return (y - mean) * lax.rsqrt(var + eps)

    w1 = w1_ref[...]                     # (9, Cp, Cp), resident across grid
    w2 = w2_ref[...]

    x2d = x_ref[0]                                       # (Cp, HW)
    y1 = jnp.maximum(inst_norm(conv3x3(x2d, w1)), 0.0)   # Conv-IN-ReLU
    y2 = inst_norm(conv3x3(y1, w2))                      # Conv-IN
    o_ref[0] = jnp.maximum(x2d + y2, 0.0)                # ReLU(x + block)


def residual_attention_block(x_nchw, orig_img, w1, b1, w2, b2):
    """x_nchw: (N, C, H, W) float32; returns (N, C, H, W)."""
    del orig_img   # identity attention (attn_type=None) ignores orig_img
    del b1, b2     # conv biases are exactly cancelled by InstanceNorm
    N, C, H, W = x_nchw.shape
    assert H >= 2 and W >= 2, "reflect padding needs H, W >= 2"
    HW = H * W
    Cp = ((C + 7) // 8) * 8              # pad channels to full sublanes

    # Layout-preserving reshape (NCHW memory == (N, C, H*W)) + channel pad.
    x_flat = x_nchw.reshape(N, C, HW).astype(jnp.float32)
    if Cp != C:
        x_flat = jnp.pad(x_flat, ((0, 0), (0, Cp - C), (0, 0)))

    def prep_w(w):
        # PyTorch Conv2d weight (Cout, Cin, 3, 3) -> per-tap stack (9, Cp, Cp)
        # with tap order t = (dh+1)*3 + (dw+1) matching the kernel loop.
        w = w.astype(jnp.float32)
        if Cp != C:
            w = jnp.pad(w, ((0, Cp - C), (0, Cp - C), (0, 0), (0, 0)))
        return jnp.transpose(w, (2, 3, 0, 1)).reshape(9, Cp, Cp)

    W1 = prep_w(w1)
    W2 = prep_w(w2)

    kernel = functools.partial(_res_block_kernel, Cp=Cp, H=H, W=W)

    cost = pl.CostEstimate(
        flops=N * 2 * 2 * 9 * Cp * Cp * HW,
        transcendentals=N * 2 * Cp,
        bytes_accessed=4 * (2 * N * Cp * HW + 2 * 9 * Cp * Cp),
    )

    out_flat = pl.pallas_call(
        kernel,
        out_shape=jax.ShapeDtypeStruct((N, Cp, HW), jnp.float32),
        grid=(N,),
        in_specs=[
            pl.BlockSpec((1, Cp, HW), lambda n: (n, 0, 0)),
            pl.BlockSpec((9, Cp, Cp), lambda n: (0, 0, 0)),   # resident
            pl.BlockSpec((9, Cp, Cp), lambda n: (0, 0, 0)),   # resident
        ],
        out_specs=pl.BlockSpec((1, Cp, HW), lambda n: (n, 0, 0)),
        compiler_params=pltpu.CompilerParams(
            dimension_semantics=("parallel",)),
        cost_estimate=cost,
    )(x_flat, W1, W2)

    return out_flat[:, :C, :].reshape(N, C, H, W)


def _reference(x, w1, b1, w2, b2):
    """Pure-JAX reference of the PyTorch forward (NCHW)."""
    def conv(xn, w, b):
        xp = jnp.pad(xn, ((0, 0), (0, 0), (1, 1), (1, 1)), mode="reflect")
        y = lax.conv_general_dilated(
            xp, w, window_strides=(1, 1), padding="VALID",
            dimension_numbers=("NCHW", "OIHW", "NCHW"))
        return y + b[None, :, None, None]

    def inorm(y):
        m = y.mean(axis=(2, 3), keepdims=True)
        v = ((y - m) ** 2).mean(axis=(2, 3), keepdims=True)
        return (y - m) / jnp.sqrt(v + 1e-5)

    y1 = jax.nn.relu(inorm(conv(x, w1, b1)))
    y2 = inorm(conv(y1, w2, b2))
    return jax.nn.relu(x + y2)


if __name__ == "__main__":
    N, C, H, W = 2, 4, 16, 16  # spatial_dim = 16, channels = 4

    key = jax.random.PRNGKey(0)
    kx, ko, kw1, kb1, kw2, kb2 = jax.random.split(key, 6)
    x = jax.random.normal(kx, (N, C, H, W), dtype=jnp.float32)
    orig_img = jax.random.normal(ko, (N, C, H, W), dtype=jnp.float32)
    w1 = jax.random.normal(kw1, (C, C, 3, 3), dtype=jnp.float32) * 0.1
    b1 = jax.random.normal(kb1, (C,), dtype=jnp.float32) * 0.1
    w2 = jax.random.normal(kw2, (C, C, 3, 3), dtype=jnp.float32) * 0.1
    b2 = jax.random.normal(kb2, (C,), dtype=jnp.float32) * 0.1

    out = residual_attention_block(x, orig_img, w1, b1, w2, b2)
    out = jax.block_until_ready(out)

    ref = jax.block_until_ready(_reference(x, w1, b1, w2, b2))
    assert out.shape == (N, C, H, W)
    np.testing.assert_allclose(np.asarray(out), np.asarray(ref),
                               rtol=1e-4, atol=1e-4)
    print("KERNEL_OK")
</pallas_src>

<mosaic_0001>
module attributes {stable_mosaic.version = 11 : i64} {
  func.func @_res_block_kernel(%arg0: i32, %arg1: memref<1x8x256xf32, #tpu.memory_space<vmem>>, %arg2: memref<9x8x8xf32, #tpu.memory_space<vmem>>, %arg3: memref<9x8x8xf32, #tpu.memory_space<vmem>>, %arg4: memref<1x8x256xf32, #tpu.memory_space<vmem>>) attributes {dimension_semantics = [#tpu.dimension_semantics<parallel>], iteration_bounds = array<i64: 2>, scalar_prefetch = 0 : i64, scratch_operands = 0 : i64, tpu.core_type = #tpu.core_type<tc>, window_params = [{transform_indices = @transform_0, window_bounds = array<i64: 1, 8, 256>}, {pipeline_mode = #tpu.pipeline_mode<synchronous>, transform_indices = @transform_1, window_bounds = array<i64: 9, 8, 8>}, {pipeline_mode = #tpu.pipeline_mode<synchronous>, transform_indices = @transform_2, window_bounds = array<i64: 9, 8, 8>}, {transform_indices = @transform_3, window_bounds = array<i64: 1, 8, 256>}]} {
    %0 = tpu.iota {dimensions = array<i32: 1>} : vector<8x256xi32>
    %c16_i32 = arith.constant 16 : i32
    %1 = vector.broadcast %c16_i32 : i32 to vector<8x256xi32>
    %2 = arith.cmpi slt, %0, %1 : vector<8x256xi32>
    %c240_i32 = arith.constant 240 : i32
    %3 = vector.broadcast %c240_i32 : i32 to vector<8x256xi32>
    %4 = arith.cmpi sge, %0, %3 : vector<8x256xi32>
    %c16_i32_0 = arith.constant 16 : i32
    %c0_i32 = arith.constant 0 : i32
    %5 = arith.cmpi eq, %c16_i32_0, %c0_i32 : i32
    %c1_i32 = arith.constant 1 : i32
    %6 = arith.select %5, %c1_i32, %c16_i32_0 : i32
    %7 = vector.broadcast %6 : i32 to vector<8x256xi32>
    %8 = arith.remsi %0, %7 : vector<8x256xi32>
    %c0_i32_1 = arith.constant 0 : i32
    %9 = vector.broadcast %c0_i32_1 : i32 to vector<8x256xi32>
    %10 = arith.cmpi ne, %8, %9 : vector<8x256xi32>
    %c0_i32_2 = arith.constant 0 : i32
    %11 = vector.broadcast %c0_i32_2 : i32 to vector<8x256xi32>
    %12 = arith.cmpi slt, %8, %11 : vector<8x256xi32>
    %c0_i32_3 = arith.constant 0 : i32
    %13 = arith.cmpi slt, %6, %c0_i32_3 : i32
    %14 = vector.broadcast %13 : i1 to vector<8x256xi1>
    %15 = vector.broadcast %14 : vector<8x256xi1> to vector<8x256xi1>
    %16 = arith.xori %12, %15 : vector<8x256xi1>
    %17 = arith.andi %16, %10 : vector<8x256xi1>
    %18 = vector.broadcast %6 : i32 to vector<8x256xi32>
    %19 = arith.addi %8, %18 : vector<8x256xi32>
    %20 = arith.select %17, %19, %8 : vector<8x256xi1>, vector<8x256xi32>
    %c0_i32_4 = arith.constant 0 : i32
    %21 = vector.broadcast %c0_i32_4 : i32 to vector<8x256xi32>
    %22 = arith.cmpi eq, %20, %21 : vector<8x256xi32>
    %c16_i32_5 = arith.constant 16 : i32
    %c0_i32_6 = arith.constant 0 : i32
    %23 = arith.cmpi eq, %c16_i32_5, %c0_i32_6 : i32
    %c1_i32_7 = arith.constant 1 : i32
    %24 = arith.select %23, %c1_i32_7, %c16_i32_5 : i32
    %25 = vector.broadcast %24 : i32 to vector<8x256xi32>
    %26 = arith.remsi %0, %25 : vector<8x256xi32>
    %c0_i32_8 = arith.constant 0 : i32
    %27 = vector.broadcast %c0_i32_8 : i32 to vector<8x256xi32>
    %28 = arith.cmpi ne, %26, %27 : vector<8x256xi32>
    %c0_i32_9 = arith.constant 0 : i32
    %29 = vector.broadcast %c0_i32_9 : i32 to vector<8x256xi32>
    %30 = arith.cmpi slt, %26, %29 : vector<8x256xi32>
    %c0_i32_10 = arith.constant 0 : i32
    %31 = arith.cmpi slt, %24, %c0_i32_10 : i32
    %32 = vector.broadcast %31 : i1 to vector<8x256xi1>
    %33 = vector.broadcast %32 : vector<8x256xi1> to vector<8x256xi1>
    %34 = arith.xori %30, %33 : vector<8x256xi1>
    %35 = arith.andi %34, %28 : vector<8x256xi1>
    %36 = vector.broadcast %24 : i32 to vector<8x256xi32>
    %37 = arith.addi %26, %36 : vector<8x256xi32>
    %38 = arith.select %35, %37, %26 : vector<8x256xi1>, vector<8x256xi32>
    %c15_i32 = arith.constant 15 : i32
    %39 = vector.broadcast %c15_i32 : i32 to vector<8x256xi32>
    %40 = arith.cmpi eq, %38, %39 : vector<8x256xi32>
    %c0 = arith.constant 0 : index
    %c0_11 = arith.constant 0 : index
    %c0_12 = arith.constant 0 : index
    %41 = vector.load %arg2[%c0, %c0_11, %c0_12] : memref<9x8x8xf32, #tpu.memory_space<vmem>>, vector<9x8x8xf32>
    %c0_13 = arith.constant 0 : index
    %c0_14 = arith.constant 0 : index
    %c0_15 = arith.constant 0 : index
    %42 = vector.load %arg3[%c0_13, %c0_14, %c0_15] : memref<9x8x8xf32, #tpu.memory_space<vmem>>, vector<9x8x8xf32>
    %c0_16 = arith.constant 0 : index
    %c0_17 = arith.constant 0 : index
    %c0_18 = arith.constant 0 : index
    %43 = vector.load %arg1[%c0_16, %c0_17, %c0_18] : memref<1x8x256xf32, #tpu.memory_space<vmem>>, vector<1x8x256xf32>
    %44 = vector.shape_cast %43 : vector<1x8x256xf32> to vector<8x256xf32>
    %c16_i32_19 = arith.constant 16 : i32
    %45 = tpu.dynamic_rotate %44 by %c16_i32_19 dim 1 : vector<8x256xf32>, i32 -> vector<8x256xf32>
    %c240_i32_20 = arith.constant 240 : i32
    %46 = tpu.dynamic_rotate %44 by %c240_i32_20 dim 1 : vector<8x256xf32>, i32 -> vector<8x256xf32>
    %47 = arith.select %2, %46, %45 : vector<8x256xi1>, vector<8x256xf32>
    %48 = arith.select %4, %45, %46 : vector<8x256xi1>, vector<8x256xf32>
    %cst = arith.constant 0.000000e+00 : f32
    %49 = vector.broadcast %cst : f32 to vector<8x256xf32>
    %c1_i32_21 = arith.constant 1 : i32
    %50 = tpu.dynamic_rotate %47 by %c1_i32_21 dim 1 : vector<8x256xf32>, i32 -> vector<8x256xf32>
    %c255_i32 = arith.constant 255 : i32
    %51 = tpu.dynamic_rotate %47 by %c255_i32 dim 1 : vector<8x256xf32>, i32 -> vector<8x256xf32>
    %52 = arith.select %22, %51, %50 : vector<8x256xi1>, vector<8x256xf32>
    %53 = arith.select %40, %50, %51 : vector<8x256xi1>, vector<8x256xf32>
    %54 = vector.extract_strided_slice %41 {offsets = [0, 0, 0], sizes = [1, 8, 8], strides = [1, 1, 1]} : vector<9x8x8xf32> to vector<1x8x8xf32>
    %55 = vector.shape_cast %54 : vector<1x8x8xf32> to vector<8x8xf32>
    %cst_22 = arith.constant dense<0.000000e+00> : vector<8x256xf32>
    %56 = tpu.matmul %55, %52, %cst_22 {dimension_numbers = #tpu.dot_dimension_numbers<[1], [0], [0], [1], [0, 0, 1, 1], [], []>} : vector<8x8xf32>, vector<8x256xf32>, vector<8x256xf32> -> vector<8x256xf32>
    %57 = arith.addf %49, %56 : vector<8x256xf32>
    %58 = vector.extract_strided_slice %41 {offsets = [1, 0, 0], sizes = [1, 8, 8], strides = [1, 1, 1]} : vector<9x8x8xf32> to vector<1x8x8xf32>
    %59 = vector.shape_cast %58 : vector<1x8x8xf32> to vector<8x8xf32>
    %cst_23 = arith.constant dense<0.000000e+00> : vector<8x256xf32>
    %60 = tpu.matmul %59, %47, %cst_23 {dimension_numbers = #tpu.dot_dimension_numbers<[1], [0], [0], [1], [0, 0, 1, 1], [], []>} : vector<8x8xf32>, vector<8x256xf32>, vector<8x256xf32> -> vector<8x256xf32>
    %61 = arith.addf %57, %60 : vector<8x256xf32>
    %62 = vector.extract_strided_slice %41 {offsets = [2, 0, 0], sizes = [1, 8, 8], strides = [1, 1, 1]} : vector<9x8x8xf32> to vector<1x8x8xf32>
    %63 = vector.shape_cast %62 : vector<1x8x8xf32> to vector<8x8xf32>
    %cst_24 = arith.constant dense<0.000000e+00> : vector<8x256xf32>
    %64 = tpu.matmul %63, %53, %cst_24 {dimension_numbers = #tpu.dot_dimension_numbers<[1], [0], [0], [1], [0, 0, 1, 1], [], []>} : vector<8x8xf32>, vector<8x256xf32>, vector<8x256xf32> -> vector<8x256xf32>
    %65 = arith.addf %61, %64 : vector<8x256xf32>
    %c1_i32_25 = arith.constant 1 : i32
    %66 = tpu.dynamic_rotate %44 by %c1_i32_25 dim 1 : vector<8x256xf32>, i32 -> vector<8x256xf32>
    %c255_i32_26 = arith.constant 255 : i32
    %67 = tpu.dynamic_rotate %44 by %c255_i32_26 dim 1 : vector<8x256xf32>, i32 -> vector<8x256xf32>
    %68 = arith.select %22, %67, %66 : vector<8x256xi1>, vector<8x256xf32>
    %69 = arith.select %40, %66, %67 : vector<8x256xi1>, vector<8x256xf32>
    %70 = vector.extract_strided_slice %41 {offsets = [3, 0, 0], sizes = [1, 8, 8], strides = [1, 1, 1]} : vector<9x8x8xf32> to vector<1x8x8xf32>
    %71 = vector.shape_cast %70 : vector<1x8x8xf32> to vector<8x8xf32>
    %cst_27 = arith.constant dense<0.000000e+00> : vector<8x256xf32>
    %72 = tpu.matmul %71, %68, %cst_27 {dimension_numbers = #tpu.dot_dimension_numbers<[1], [0], [0], [1], [0, 0, 1, 1], [], []>} : vector<8x8xf32>, vector<8x256xf32>, vector<8x256xf32> -> vector<8x256xf32>
    %73 = arith.addf %65, %72 : vector<8x256xf32>
    %74 = vector.extract_strided_slice %41 {offsets = [4, 0, 0], sizes = [1, 8, 8], strides = [1, 1, 1]} : vector<9x8x8xf32> to vector<1x8x8xf32>
    %75 = vector.shape_cast %74 : vector<1x8x8xf32> to vector<8x8xf32>
    %cst_28 = arith.constant dense<0.000000e+00> : vector<8x256xf32>
    %76 = tpu.matmul %75, %44, %cst_28 {dimension_numbers = #tpu.dot_dimension_numbers<[1], [0], [0], [1], [0, 0, 1, 1], [], []>} : vector<8x8xf32>, vector<8x256xf32>, vector<8x256xf32> -> vector<8x256xf32>
    %77 = arith.addf %73, %76 : vector<8x256xf32>
    %78 = vector.extract_strided_slice %41 {offsets = [5, 0, 0], sizes = [1, 8, 8], strides = [1, 1, 1]} : vector<9x8x8xf32> to vector<1x8x8xf32>
    %79 = vector.shape_cast %78 : vector<1x8x8xf32> to vector<8x8xf32>
    %cst_29 = arith.constant dense<0.000000e+00> : vector<8x256xf32>
    %80 = tpu.matmul %79, %69, %cst_29 {dimension_numbers = #tpu.dot_dimension_numbers<[1], [0], [0], [1], [0, 0, 1, 1], [], []>} : vector<8x8xf32>, vector<8x256xf32>, vector<8x256xf32> -> vector<8x256xf32>
    %81 = arith.addf %77, %80 : vector<8x256xf32>
    %c1_i32_30 = arith.constant 1 : i32
    %82 = tpu.dynamic_rotate %48 by %c1_i32_30 dim 1 : vector<8x256xf32>, i32 -> vector<8x256xf32>
    %c255_i32_31 = arith.constant 255 : i32
    %83 = tpu.dynamic_rotate %48 by %c255_i32_31 dim 1 : vector<8x256xf32>, i32 -> vector<8x256xf32>
    %84 = arith.select %22, %83, %82 : vector<8x256xi1>, vector<8x256xf32>
    %85 = arith.select %40, %82, %83 : vector<8x256xi1>, vector<8x256xf32>
    %86 = vector.extract_strided_slice %41 {offsets = [6, 0, 0], sizes = [1, 8, 8], strides = [1, 1, 1]} : vector<9x8x8xf32> to vector<1x8x8xf32>
    %87 = vector.shape_cast %86 : vector<1x8x8xf32> to vector<8x8xf32>
    %cst_32 = arith.constant dense<0.000000e+00> : vector<8x256xf32>
    %88 = tpu.matmul %87, %84, %cst_32 {dimension_numbers = #tpu.dot_dimension_numbers<[1], [0], [0], [1], [0, 0, 1, 1], [], []>} : vector<8x8xf32>, vector<8x256xf32>, vector<8x256xf32> -> vector<8x256xf32>
    %89 = arith.addf %81, %88 : vector<8x256xf32>
    %90 = vector.extract_strided_slice %41 {offsets = [7, 0, 0], sizes = [1, 8, 8], strides = [1, 1, 1]} : vector<9x8x8xf32> to vector<1x8x8xf32>
    %91 = vector.shape_cast %90 : vector<1x8x8xf32> to vector<8x8xf32>
    %cst_33 = arith.constant dense<0.000000e+00> : vector<8x256xf32>
    %92 = tpu.matmul %91, %48, %cst_33 {dimension_numbers = #tpu.dot_dimension_numbers<[1], [0], [0], [1], [0, 0, 1, 1], [], []>} : vector<8x8xf32>, vector<8x256xf32>, vector<8x256xf32> -> vector<8x256xf32>
    %93 = arith.addf %89, %92 : vector<8x256xf32>
    %94 = vector.extract_strided_slice %41 {offsets = [8, 0, 0], sizes = [1, 8, 8], strides = [1, 1, 1]} : vector<9x8x8xf32> to vector<1x8x8xf32>
    %95 = vector.shape_cast %94 : vector<1x8x8xf32> to vector<8x8xf32>
    %cst_34 = arith.constant dense<0.000000e+00> : vector<8x256xf32>
    %96 = tpu.matmul %95, %85, %cst_34 {dimension_numbers = #tpu.dot_dimension_numbers<[1], [0], [0], [1], [0, 0, 1, 1], [], []>} : vector<8x8xf32>, vector<8x256xf32>, vector<8x256xf32> -> vector<8x256xf32>
    %97 = arith.addf %93, %96 : vector<8x256xf32>
    %cst_35 = arith.constant dense<0.000000e+00> : vector<8xf32>
    %98 = vector.multi_reduction <add>, %97, %cst_35 [1] : vector<8x256xf32> to vector<8xf32>
    %99 = vector.shape_cast %98 : vector<8xf32> to vector<8x1xf32>
    %100 = arith.mulf %97, %97 : vector<8x256xf32>
    %cst_36 = arith.constant dense<0.000000e+00> : vector<8xf32>
    %101 = vector.multi_reduction <add>, %100, %cst_36 [1] : vector<8x256xf32> to vector<8xf32>
    %102 = vector.shape_cast %101 : vector<8xf32> to vector<8x1xf32>
    %cst_37 = arith.constant 3.906250e-03 : f32
    %103 = vector.broadcast %cst_37 : f32 to vector<8x1xf32>
    %104 = arith.mulf %99, %103 : vector<8x1xf32>
    %cst_38 = arith.constant 3.906250e-03 : f32
    %105 = vector.broadcast %cst_38 : f32 to vector<8x1xf32>
    %106 = arith.mulf %102, %105 : vector<8x1xf32>
    %107 = arith.mulf %104, %104 : vector<8x1xf32>
    %108 = arith.subf %106, %107 : vector<8x1xf32>
    %cst_39 = arith.constant 0.000000e+00 : f32
    %109 = vector.broadcast %cst_39 : f32 to vector<8x1xf32>
    %110 = arith.maximumf %108, %109 : vector<8x1xf32>
    %111 = vector.broadcast %104 : vector<8x1xf32> to vector<8x256xf32>
    %112 = arith.subf %97, %111 : vector<8x256xf32>
    %cst_40 = arith.constant 9.99999974E-6 : f32
    %113 = vector.broadcast %cst_40 : f32 to vector<8x1xf32>
    %114 = arith.addf %110, %113 : vector<8x1xf32>
    %115 = math.rsqrt %114 : vector<8x1xf32>
    %116 = vector.broadcast %115 : vector<8x1xf32> to vector<8x256xf32>
    %117 = arith.mulf %112, %116 : vector<8x256xf32>
    %cst_41 = arith.constant 0.000000e+00 : f32
    %118 = vector.broadcast %cst_41 : f32 to vector<8x256xf32>
    %119 = arith.maximumf %117, %118 : vector<8x256xf32>
    %c16_i32_42 = arith.constant 16 : i32
    %120 = tpu.dynamic_rotate %119 by %c16_i32_42 dim 1 : vector<8x256xf32>, i32 -> vector<8x256xf32>
    %c240_i32_43 = arith.constant 240 : i32
    %121 = tpu.dynamic_rotate %119 by %c240_i32_43 dim 1 : vector<8x256xf32>, i32 -> vector<8x256xf32>
    %122 = arith.select %2, %121, %120 : vector<8x256xi1>, vector<8x256xf32>
    %123 = arith.select %4, %120, %121 : vector<8x256xi1>, vector<8x256xf32>
    %cst_44 = arith.constant 0.000000e+00 : f32
    %124 = vector.broadcast %cst_44 : f32 to vector<8x256xf32>
    %c1_i32_45 = arith.constant 1 : i32
    %125 = tpu.dynamic_rotate %122 by %c1_i32_45 dim 1 : vector<8x256xf32>, i32 -> vector<8x256xf32>
    %c255_i32_46 = arith.constant 255 : i32
    %126 = tpu.dynamic_rotate %122 by %c255_i32_46 dim 1 : vector<8x256xf32>, i32 -> vector<8x256xf32>
    %127 = arith.select %22, %126, %125 : vector<8x256xi1>, vector<8x256xf32>
    %128 = arith.select %40, %125, %126 : vector<8x256xi1>, vector<8x256xf32>
    %129 = vector.extract_strided_slice %42 {offsets = [0, 0, 0], sizes = [1, 8, 8], strides = [1, 1, 1]} : vector<9x8x8xf32> to vector<1x8x8xf32>
    %130 = vector.shape_cast %129 : vector<1x8x8xf32> to vector<8x8xf32>
    %cst_47 = arith.constant dense<0.000000e+00> : vector<8x256xf32>
    %131 = tpu.matmul %130, %127, %cst_47 {dimension_numbers = #tpu.dot_dimension_numbers<[1], [0], [0], [1], [0, 0, 1, 1], [], []>} : vector<8x8xf32>, vector<8x256xf32>, vector<8x256xf32> -> vector<8x256xf32>
    %132 = arith.addf %124, %131 : vector<8x256xf32>
    %133 = vector.extract_strided_slice %42 {offsets = [1, 0, 0], sizes = [1, 8, 8], strides = [1, 1, 1]} : vector<9x8x8xf32> to vector<1x8x8xf32>
    %134 = vector.shape_cast %133 : vector<1x8x8xf32> to vector<8x8xf32>
    %cst_48 = arith.constant dense<0.000000e+00> : vector<8x256xf32>
    %135 = tpu.matmul %134, %122, %cst_48 {dimension_numbers = #tpu.dot_dimension_numbers<[1], [0], [0], [1], [0, 0, 1, 1], [], []>} : vector<8x8xf32>, vector<8x256xf32>, vector<8x256xf32> -> vector<8x256xf32>
    %136 = arith.addf %132, %135 : vector<8x256xf32>
    %137 = vector.extract_strided_slice %42 {offsets = [2, 0, 0], sizes = [1, 8, 8], strides = [1, 1, 1]} : vector<9x8x8xf32> to vector<1x8x8xf32>
    %138 = vector.shape_cast %137 : vector<1x8x8xf32> to vector<8x8xf32>
    %cst_49 = arith.constant dense<0.000000e+00> : vector<8x256xf32>
    %139 = tpu.matmul %138, %128, %cst_49 {dimension_numbers = #tpu.dot_dimension_numbers<[1], [0], [0], [1], [0, 0, 1, 1], [], []>} : vector<8x8xf32>, vector<8x256xf32>, vector<8x256xf32> -> vector<8x256xf32>
    %140 = arith.addf %136, %139 : vector<8x256xf32>
    %c1_i32_50 = arith.constant 1 : i32
    %141 = tpu.dynamic_rotate %119 by %c1_i32_50 dim 1 : vector<8x256xf32>, i32 -> vector<8x256xf32>
    %c255_i32_51 = arith.constant 255 : i32
    %142 = tpu.dynamic_rotate %119 by %c255_i32_51 dim 1 : vector<8x256xf32>, i32 -> vector<8x256xf32>
    %143 = arith.select %22, %142, %141 : vector<8x256xi1>, vector<8x256xf32>
    %144 = arith.select %40, %141, %142 : vector<8x256xi1>, vector<8x256xf32>
    %145 = vector.extract_strided_slice %42 {offsets = [3, 0, 0], sizes = [1, 8, 8], strides = [1, 1, 1]} : vector<9x8x8xf32> to vector<1x8x8xf32>
    %146 = vector.shape_cast %145 : vector<1x8x8xf32> to vector<8x8xf32>
    %cst_52 = arith.constant dense<0.000000e+00> : vector<8x256xf32>
    %147 = tpu.matmul %146, %143, %cst_52 {dimension_numbers = #tpu.dot_dimension_numbers<[1], [0], [0], [1], [0, 0, 1, 1], [], []>} : vector<8x8xf32>, vector<8x256xf32>, vector<8x256xf32> -> vector<8x256xf32>
    %148 = arith.addf %140, %147 : vector<8x256xf32>
    %149 = vector.extract_strided_slice %42 {offsets = [4, 0, 0], sizes = [1, 8, 8], strides = [1, 1, 1]} : vector<9x8x8xf32> to vector<1x8x8xf32>
    %150 = vector.shape_cast %149 : vector<1x8x8xf32> to vector<8x8xf32>
    %cst_53 = arith.constant dense<0.000000e+00> : vector<8x256xf32>
    %151 = tpu.matmul %150, %119, %cst_53 {dimension_numbers = #tpu.dot_dimension_numbers<[1], [0], [0], [1], [0, 0, 1, 1], [], []>} : vector<8x8xf32>, vector<8x256xf32>, vector<8x256xf32> -> vector<8x256xf32>
    %152 = arith.addf %148, %151 : vector<8x256xf32>
    %153 = vector.extract_strided_slice %42 {offsets = [5, 0, 0], sizes = [1, 8, 8], strides = [1, 1, 1]} : vector<9x8x8xf32> to vector<1x8x8xf32>
    %154 = vector.shape_cast %153 : vector<1x8x8xf32> to vector<8x8xf32>
    %cst_54 = arith.constant dense<0.000000e+00> : vector<8x256xf32>
    %155 = tpu.matmul %154, %144, %cst_54 {dimension_numbers = #tpu.dot_dimension_numbers<[1], [0], [0], [1], [0, 0, 1, 1], [], []>} : vector<8x8xf32>, vector<8x256xf32>, vector<8x256xf32> -> vector<8x256xf32>
    %156 = arith.addf %152, %155 : vector<8x256xf32>
    %c1_i32_55 = arith.constant 1 : i32
    %157 = tpu.dynamic_rotate %123 by %c1_i32_55 dim 1 : vector<8x256xf32>, i32 -> vector<8x256xf32>
    %c255_i32_56 = arith.constant 255 : i32
    %158 = tpu.dynamic_rotate %123 by %c255_i32_56 dim 1 : vector<8x256xf32>, i32 -> vector<8x256xf32>
    %159 = arith.select %22, %158, %157 : vector<8x256xi1>, vector<8x256xf32>
    %160 = arith.select %40, %157, %158 : vector<8x256xi1>, vector<8x256xf32>
    %161 = vector.extract_strided_slice %42 {offsets = [6, 0, 0], sizes = [1, 8, 8], strides = [1, 1, 1]} : vector<9x8x8xf32> to vector<1x8x8xf32>
    %162 = vector.shape_cast %161 : vector<1x8x8xf32> to vector<8x8xf32>
    %cst_57 = arith.constant dense<0.000000e+00> : vector<8x256xf32>
    %163 = tpu.matmul %162, %159, %cst_57 {dimension_numbers = #tpu.dot_dimension_numbers<[1], [0], [0], [1], [0, 0, 1, 1], [], []>} : vector<8x8xf32>, vector<8x256xf32>, vector<8x256xf32> -> vector<8x256xf32>
    %164 = arith.addf %156, %163 : vector<8x256xf32>
    %165 = vector.extract_strided_slice %42 {offsets = [7, 0, 0], sizes = [1, 8, 8], strides = [1, 1, 1]} : vector<9x8x8xf32> to vector<1x8x8xf32>
    %166 = vector.shape_cast %165 : vector<1x8x8xf32> to vector<8x8xf32>
    %cst_58 = arith.constant dense<0.000000e+00> : vector<8x256xf32>
    %167 = tpu.matmul %166, %123, %cst_58 {dimension_numbers = #tpu.dot_dimension_numbers<[1], [0], [0], [1], [0, 0, 1, 1], [], []>} : vector<8x8xf32>, vector<8x256xf32>, vector<8x256xf32> -> vector<8x256xf32>
    %168 = arith.addf %164, %167 : vector<8x256xf32>
    %169 = vector.extract_strided_slice %42 {offsets = [8, 0, 0], sizes = [1, 8, 8], strides = [1, 1, 1]} : vector<9x8x8xf32> to vector<1x8x8xf32>
    %170 = vector.shape_cast %169 : vector<1x8x8xf32> to vector<8x8xf32>
    %cst_59 = arith.constant dense<0.000000e+00> : vector<8x256xf32>
    %171 = tpu.matmul %170, %160, %cst_59 {dimension_numbers = #tpu.dot_dimension_numbers<[1], [0], [0], [1], [0, 0, 1, 1], [], []>} : vector<8x8xf32>, vector<8x256xf32>, vector<8x256xf32> -> vector<8x256xf32>
    %172 = arith.addf %168, %171 : vector<8x256xf32>
    %cst_60 = arith.constant dense<0.000000e+00> : vector<8xf32>
    %173 = vector.multi_reduction <add>, %172, %cst_60 [1] : vector<8x256xf32> to vector<8xf32>
    %174 = vector.shape_cast %173 : vector<8xf32> to vector<8x1xf32>
    %175 = arith.mulf %172, %172 : vector<8x256xf32>
    %cst_61 = arith.constant dense<0.000000e+00> : vector<8xf32>
    %176 = vector.multi_reduction <add>, %175, %cst_61 [1] : vector<8x256xf32> to vector<8xf32>
    %177 = vector.shape_cast %176 : vector<8xf32> to vector<8x1xf32>
    %cst_62 = arith.constant 3.906250e-03 : f32
    %178 = vector.broadcast %cst_62 : f32 to vector<8x1xf32>
    %179 = arith.mulf %174, %178 : vector<8x1xf32>
    %cst_63 = arith.constant 3.906250e-03 : f32
    %180 = vector.broadcast %cst_63 : f32 to vector<8x1xf32>
    %181 = arith.mulf %177, %180 : vector<8x1xf32>
    %182 = arith.mulf %179, %179 : vector<8x1xf32>
    %183 = arith.subf %181, %182 : vector<8x1xf32>
    %cst_64 = arith.constant 0.000000e+00 : f32
    %184 = vector.broadcast %cst_64 : f32 to vector<8x1xf32>
    %185 = arith.maximumf %183, %184 : vector<8x1xf32>
    %186 = vector.broadcast %179 : vector<8x1xf32> to vector<8x256xf32>
    %187 = arith.subf %172, %186 : vector<8x256xf32>
    %cst_65 = arith.constant 9.99999974E-6 : f32
    %188 = vector.broadcast %cst_65 : f32 to vector<8x1xf32>
    %189 = arith.addf %185, %188 : vector<8x1xf32>
    %190 = math.rsqrt %189 : vector<8x1xf32>
    %191 = vector.broadcast %190 : vector<8x1xf32> to vector<8x256xf32>
    %192 = arith.mulf %187, %191 : vector<8x256xf32>
    %193 = arith.addf %44, %192 : vector<8x256xf32>
    %cst_66 = arith.constant 0.000000e+00 : f32
    %194 = vector.broadcast %cst_66 : f32 to vector<8x256xf32>
    %195 = arith.maximumf %193, %194 : vector<8x256xf32>
    %c0_67 = arith.constant 0 : index
    %c0_68 = arith.constant 0 : index
    %c0_69 = arith.constant 0 : index
    %196 = vector.load %arg4[%c0_67, %c0_68, %c0_69] : memref<1x8x256xf32, #tpu.memory_space<vmem>>, vector<1x8x256xf32>
    %197 = vector.shape_cast %196 : vector<1x8x256xf32> to vector<8x256xf32>
    %198 = vector.shape_cast %195 : vector<8x256xf32> to vector<1x8x256xf32>
    tpu.vector_store %arg4[%c0_67, %c0_68, %c0_69], %198 {strides = array<i32>} : memref<1x8x256xf32, #tpu.memory_space<vmem>>, vector<1x8x256xf32>,
    return
  }
  func.func @transform_0(%arg0: i32) -> (i32, i32, i32) {
    %c0_i32 = arith.constant 0 : i32
    %c0_i32_0 = arith.constant 0 : i32
    %c0_i32_1 = arith.constant 0 : i32
    return %arg0, %c0_i32, %c0_i32_0 : i32, i32, i32
  }
  func.func @transform_1(%arg0: i32) -> (i32, i32, i32) {
    %c0_i32 = arith.constant 0 : i32
    %c0_i32_0 = arith.constant 0 : i32
    %c0_i32_1 = arith.constant 0 : i32
    %c0_i32_2 = arith.constant 0 : i32
    return %c0_i32, %c0_i32_0, %c0_i32_1 : i32, i32, i32
  }
  func.func @transform_2(%arg0: i32) -> (i32, i32, i32) {
    %c0_i32 = arith.constant 0 : i32
    %c0_i32_0 = arith.constant 0 : i32
    %c0_i32_1 = arith.constant 0 : i32
    %c0_i32_2 = arith.constant 0 : i32
    return %c0_i32, %c0_i32_0, %c0_i32_1 : i32, i32, i32
  }
  func.func @transform_3(%arg0: i32) -> (i32, i32, i32) {
    %c0_i32 = arith.constant 0 : i32
    %c0_i32_0 = arith.constant 0 : i32
    %c0_i32_1 = arith.constant 0 : i32
    return %arg0, %c0_i32, %c0_i32_0 : i32, i32, i32
  }
}

</mosaic_0001>

<llo_original>
// kernel: tpu_custom_call.1
$region0: #{tpu_custom_call.1}
  #allocation0 [shape = 'u32[]', space=smem, size = 0x4, offset = 0x4, fixed_abs, tag = 'smem constant byte address 0x4 - core index']
  #allocation1 [shape = 'u32[144,128]{1,0:T(1,128)}', space=vmem, size = 0x12000, scoped, tag = 'internal scratch']
  %s0 = inlined_call_operand.vmem [shape: f32[2,8,256], index: 0, kind: input, shape index: {}]
  %s1 = inlined_call_operand.vmem [shape: f32[9,8,8], index: 1, kind: input, shape index: {}]
  %s2 = inlined_call_operand.vmem [shape: f32[9,8,8], index: 2, kind: input, shape index: {}]
  %s3 = inlined_call_operand.hbm [shape: f32[2,8,256], index: 3, kind: output, shape index: {}]
  %s4 = sld [smem:[#allocation0]]
  $region45: #{tpu_custom_call.1} parent=0
    _
  %s6 = ssub.s32 1, %s4
  %s7 = scalar_select 0, %s6, %s4
  $region1: #{tpu_custom_call.1} parent=0
    #allocation2 [shape = 'u8[16384]{0}', space=vmem, size = 0x4000, scoped, tag = 'output window, operand 0']
    #allocation3 [shape = 's32[2]{0}', space=sflag, size = 0x8, scoped, tag = 'scoped memory for tpu_custom_call.1']
    %8 = vsyncpa [#allocation3], 0
    %s9 = scalar_lea.sflag [#allocation3], 1
    %10 = vsyncpa %s9, 0
    loop: start=0, step=1, limit=4
    $region2: #{tpu_custom_call.1} parent=1 // loop_pre_header
      _
    $region3: #{tpu_custom_call.1} parent=1 // loop_header
      %s12 = sphi 0, %s16
      %p13 = scmp.ge.s32.totalorder %s12, 4
      %s22 = sphi 0, %s24
      %s25 = sphi 0, %s22
      %s26 = sphi 0, %s25
      %s42 = sphi 0, %s26
      %s46 = sphi 0, %s46
      %s48 = sphi 0, %s46
      %s49 = sphi 0, %s48
      %s63 = sphi 0, %s49
      %s67 = sphi 0, %s67
      %s69 = sphi 0, %s67
      %s70 = sphi 0, %s69
      %s84 = sphi 0, %s70
      %s90 = sphi 0, %s92
      %s93 = sphi 0, %s90
      %s94 = sphi 0, %s93
      %s110 = sphi 0, %s94
    $region4: #{tpu_custom_call.1} parent=1 // loop_header_branch
      %15 = sbr.rel (%p13) target = $region8
    $region5: #{tpu_custom_call.1} parent=1 // loop_body
      %s17 = ssub.s32 %s12, 1
      %s18 = ssub.s32 %s12, 2
      %s19 = sadd.s32 %s12, 1
      %s20 = ssub.s32 %s12, %s19
      %p21 = scmp.eq.s32.totalorder %s20, 0
      %s23 = sadd.s32 %s22, 1
      %s24 = scalar_select %p21, %s22, %s23
      %p27 = pneg %p21
      %p28 = scmp.eq.s32.totalorder %s12, 1
      %p29 = por %p27, %p28
      %p30 = scmp.ne.s32.totalorder %s22, %s25
      %p31 = scmp.eq.s32.totalorder %s12, 0
      %p32 = por %p30, %p31
      %p33 = scmp.ne.s32.totalorder %s22, %s25
      %p34 = scmp.eq.s32.totalorder %s17, 1
      %p35 = por %p33, %p34
      %p36 = scmp.ne.s32.totalorder %s25, %s26
      %p37 = scmp.eq.s32.totalorder %s17, 0
      %p38 = por %p36, %p37
      %p39 = scmp.ne.s32.totalorder %s25, %s26
      %p40 = scmp.eq.s32.totalorder %s18, 1
      %p41 = por %p39, %p40
      %p43 = scmp.ne.s32.totalorder %s26, %s42
      %p44 = scmp.eq.s32.totalorder %s18, 0
      %p45 = por %p43, %p44
      %s47 = sadd.s32 %s46, 1
      %p50 = scmp.eq.s32.totalorder %s12, 1
      %p51 = scmp.ne.s32.totalorder %s46, %s48
      %p52 = scmp.eq.s32.totalorder %s12, 0
      %p53 = por %p51, %p52
      %p54 = scmp.ne.s32.totalorder %s46, %s48
      %p55 = scmp.eq.s32.totalorder %s17, 1
      %p56 = por %p54, %p55
      %p57 = scmp.ne.s32.totalorder %s48, %s49
      %p58 = scmp.eq.s32.totalorder %s17, 0
      %p59 = por %p57, %p58
      %p60 = scmp.ne.s32.totalorder %s48, %s49
      %p61 = scmp.eq.s32.totalorder %s18, 1
      %p62 = por %p60, %p61
      %p64 = scmp.ne.s32.totalorder %s49, %s63
      %p65 = scmp.eq.s32.totalorder %s18, 0
      %p66 = por %p64, %p65
      %s68 = sadd.s32 %s67, 1
      %p71 = scmp.eq.s32.totalorder %s12, 1
      %p72 = scmp.ne.s32.totalorder %s67, %s69
      %p73 = scmp.eq.s32.totalorder %s12, 0
      %p74 = por %p72, %p73
      %p75 = scmp.ne.s32.totalorder %s67, %s69
      %p76 = scmp.eq.s32.totalorder %s17, 1
      %p77 = por %p75, %p76
      %p78 = scmp.ne.s32.totalorder %s69, %s70
      %p79 = scmp.eq.s32.totalorder %s17, 0
      %p80 = por %p78, %p79
      %p81 = scmp.ne.s32.totalorder %s69, %s70
      %p82 = scmp.eq.s32.totalorder %s18, 1
      %p83 = por %p81, %p82
      %p85 = scmp.ne.s32.totalorder %s70, %s84
      %p86 = scmp.eq.s32.totalorder %s18, 0
      %p87 = por %p85, %p86
      %s88 = ssub.s32 %s12, %s19
      %p89 = scmp.eq.s32.totalorder %s88, 0
      %s91 = sadd.s32 %s90, 1
      %s92 = scalar_select %p89, %s90, %s91
      %p95 = pneg %p89
      %p96 = scmp.eq.s32.totalorder %s12, 1
      %p97 = por %p95, %p96
      %p98 = scmp.ne.s32.totalorder %s90, %s93
      %p99 = scmp.eq.s32.totalorder %s12, 0
      %p100 = por %p98, %p99
      %p101 = scmp.ne.s32.totalorder %s90, %s93
      %p102 = scmp.eq.s32.totalorder %s17, 1
      %p103 = por %p101, %p102
      %p104 = scmp.ne.s32.totalorder %s93, %s94
      %p105 = scmp.eq.s32.totalorder %s17, 0
      %p106 = por %p104, %p105
      %p107 = scmp.ne.s32.totalorder %s93, %s94
      %p108 = scmp.eq.s32.totalorder %s18, 1
      %p109 = por %p107, %p108
      %p111 = scmp.ne.s32.totalorder %s94, %s110
      %p112 = scmp.eq.s32.totalorder %s18, 0
      %p113 = por %p111, %p112
      %p114 = scmp.le.s32.totalorder 1, %s12
      %p115 = scmp.lt.s32.totalorder %s12, 3
      %p116 = pnand %p114, %p115
      %p117 = pneg %p116
      // Predicated region
      $region9: #{tpu_custom_call.1} parent=5 // pred_check
        _
      $region10: #{tpu_custom_call.1} parent=5 // pred_check_branch
        %119 = sbr.rel (%p116) target = $region12
      $region11: #{tpu_custom_call.1} parent=5 // pred_region
        %s120 = ssub.s32 %s12, 1
        // Predicated region
        $region13: #{tpu_custom_call.1} parent=11 // pred_check
          %p121 = pneg %p59
        $region14: #{tpu_custom_call.1} parent=11 // pred_check_branch
          %123 = sbr.rel (%p121) target = $region16
        $region15: #{tpu_custom_call.1} parent=11 // pred_region
          _
        $region16: #{tpu_custom_call.1} parent=11 // pred_fallthru
          _
        // Predicated region
        $region17: #{tpu_custom_call.1} parent=11 // pred_check
          %p124 = pneg %p80
        $region18: #{tpu_custom_call.1} parent=11 // pred_check_branch
          %126 = sbr.rel (%p124) target = $region20
        $region19: #{tpu_custom_call.1} parent=11 // pred_region
          _
        $region20: #{tpu_custom_call.1} parent=11 // pred_fallthru
          _
      $region12: #{tpu_custom_call.1} parent=5 // pred_fallthru
        _
      %p127 = scmp.lt.s32.totalorder %s12, 2
      // Predicated region
      $region21: #{tpu_custom_call.1} parent=5 // pred_check
        %p128 = pneg %p127
      $region22: #{tpu_custom_call.1} parent=5 // pred_check_branch
        %130 = sbr.rel (%p128) target = $region24
      $region23: #{tpu_custom_call.1} parent=5 // pred_region
        // Predicated region
        $region25: #{tpu_custom_call.1} parent=23 // pred_check
          %p131 = pneg %p32
        $region26: #{tpu_custom_call.1} parent=23 // pred_check_branch
          %133 = sbr.rel (%p131) target = $region28
        $region27: #{tpu_custom_call.1} parent=23 // pred_region
          %p134 = scmp.lt.s32.totalorder %s12, 1
          %s135 = scalar_select %p134, %s12, 1
          %s136 = smul.addr %s135, 2
          %s137 = smul.addr %s136, 8
          %s138 = scalar_lea.vmem %s0, %s137
        $region28: #{tpu_custom_call.1} parent=23 // pred_fallthru
          _
      $region24: #{tpu_custom_call.1} parent=5 // pred_fallthru
        _
      %p139 = scmp.le.s32.totalorder 1, %s12
      %p140 = scmp.lt.s32.totalorder %s12, 3
      %p141 = pnand %p139, %p140
      %p142 = pneg %p141
      // Predicated region
      $region29: #{tpu_custom_call.1} parent=5 // pred_check
        _
      $region30: #{tpu_custom_call.1} parent=5 // pred_check_branch
        %144 = sbr.rel (%p141) target = $region32
      $region31: #{tpu_custom_call.1} parent=5 // pred_region
        %s145 = ssub.s32 %s12, 1
        %p146 = scmp.lt.s32.totalorder %s17, 1
        %s147 = scalar_select %p146, %s17, 1
        %s148 = smul.addr %s147, 2
        %s149 = smul.addr %s148, 8
        %s150 = scalar_lea.vmem %s0, %s149
        %p151 = pneg %p38
        %p152 = pneg %p35
        %p153 = pneg %p59
        %p154 = pneg %p56
        %p155 = pneg %p80
        %p156 = pneg %p77
        %p157 = pneg %p106
        %p158 = pneg %p103
        %s159 = sand.u32 %s93, 1
        %s160 = scalar_lea.sflag [#allocation3], %s159
        %s161 = sand.u32 %s93, 1
        %s162 = smul.addr %s161, 16
        %s163 = scalar_lea.vmem [#allocation2], %s162
        %p164 = scmp.lt.s32.totalorder %s17, 1
        %s165 = scalar_select %p164, %s17, 1
        %s166 = smul.addr %s165, 2
        %s167 = smul.addr %s166, 8
        %s168 = scalar_lea.vmem %s0, %s167
        %v169 = vlaneseq
        %v170 = vand.u32 %v169, 127
        %v171 = vadd.s32 %v170, 128
        %vm172 = vcmp.lt.s32.totalorder %v170, 16
        %vm173 = vcmp.lt.s32.totalorder %v171, 16
        %vm174 = vcmp.ge.s32.totalorder %v170, 240
        %vm175 = vcmp.ge.s32.totalorder %v171, 240
        %vm176 = vcmp.lt.s32.totalorder %v170, 0
        %v177 = vsub.s32 0, %v170
        %v178 = vsel %vm176, %v177, %v170
        %v179 = vshrl.u32 %v178, 4
        %v180 = vand.u32 %v178, 15
        %v181 = vsub.s32 0, %v180
        %v182 = vsel %vm176, %v181, %v180
        %vm183 = vcmp.lt.s32.totalorder %v171, 0
        %v184 = vsub.s32 0, %v171
        %v185 = vsel %vm183, %v184, %v171
        %v186 = vshrl.u32 %v185, 4
        %v187 = vand.u32 %v185, 15
        %v188 = vsub.s32 0, %v187
        %v189 = vsel %vm183, %v188, %v187
        %vm190 = vcmp.ne.s32.totalorder %v182, 0
        %vm191 = vcmp.ne.s32.totalorder %v189, 0
        %vm192 = vcmp.lt.s32.totalorder %v182, 0
        %vm193 = vcmp.lt.s32.totalorder %v189, 0
        %vm194 = vmand %vm192, %vm190
        %vm195 = vmand %vm193, %vm191
        %v196 = vadd.s32 %v182, 16
        %v197 = vadd.s32 %v189, 16
        %v198 = vsel %vm194, %v196, %v182
        %v199 = vsel %vm195, %v197, %v189
        %vm200 = vcmp.eq.s32.totalorder %v198, 0
        %vm201 = vcmp.eq.s32.totalorder %v199, 0
        %vm202 = vcmp.eq.s32.totalorder %v198, 15
        %vm203 = vcmp.eq.s32.totalorder %v199, 15
        %v204 = vld [vmem:[%s1] sm:$0xff]
        %v205 = vld [vmem:[%s1 + $0x8] sm:$0xff]
        %v206 = vld [vmem:[%s1 + $0x10] sm:$0xff]
        %v207 = vld [vmem:[%s1 + $0x18] sm:$0xff]
        %v208 = vld [vmem:[%s1 + $0x20] sm:$0xff]
        %v209 = vld [vmem:[%s1 + $0x28] sm:$0xff]
        %v210 = vld [vmem:[%s1 + $0x30] sm:$0xff]
        %v211 = vld [vmem:[%s1 + $0x38] sm:$0xff]
        %v212 = vld [vmem:[%s1 + $0x40] sm:$0xff]
        %v213 = vld [vmem:[%s2] sm:$0xff]
        %v214 = vld [vmem:[%s2 + $0x8] sm:$0xff]
        %v215 = vld [vmem:[%s2 + $0x10] sm:$0xff]
        %v216 = vld [vmem:[%s2 + $0x18] sm:$0xff]
        %v217 = vld [vmem:[%s2 + $0x20] sm:$0xff]
        %v218 = vld [vmem:[%s2 + $0x28] sm:$0xff]
        %v219 = vld [vmem:[%s2 + $0x30] sm:$0xff]
        %v220 = vld [vmem:[%s2 + $0x38] sm:$0xff]
        %v221 = vld [vmem:[%s2 + $0x40] sm:$0xff]
        %v222 = vld [vmem:[%s168] sm:$0xff]
        %v223 = vld [vmem:[%s168 + $0x8] sm:$0xff]
        %224 = vrot.lane.b32.xlu0 %v222, 16
        %v225 = vpop.permute.xlu0 %224
        %226 = vrot.lane.b32.xlu0 %v223, 16
        %v227 = vpop.permute.xlu0 %226
        %v228 = vsel %vm172, %v225, %v227
        %v229 = vsel %vm172, %v227, %v225
        %230 = vrot.lane.b32.xlu0 %v222, 112
        %v231 = vpop.permute.xlu0 %230
        %232 = vrot.lane.b32.xlu0 %v223, 112
        %v233 = vpop.permute.xlu0 %232
        %vm234 = vcmp.lt.s32.totalorder %v170, 112
        %v235 = vsel %vm234, %v231, %v233
        %v236 = vsel %vm234, %v233, %v231
        %v237 = vsel %vm172, %v235, %v229
        %v238 = vsel %vm173, %v236, %v228
        %v239 = vsel %vm174, %v229, %v235
        %v240 = vsel %vm175, %v228, %v236
        %241 = vrot.lane.b32.xlu0 %v237, 1
        %v242 = vpop.permute.xlu0 %241
        %243 = vrot.lane.b32.xlu0 %v238, 1
        %v244 = vpop.permute.xlu0 %243
        %vm245 = vcmp.lt.s32.totalorder %v170, 1
        %v246 = vsel %vm245, %v242, %v244
        %v247 = vsel %vm245, %v244, %v242
        %248 = vrot.lane.b32.xlu0 %v237, 127
        %v249 = vpop.permute.xlu0 %248
        %250 = vrot.lane.b32.xlu0 %v238, 127
        %v251 = vpop.permute.xlu0 %250
        %vm252 = vcmp.lt.s32.totalorder %v170, 127
        %v253 = vsel %vm252, %v249, %v251
        %v254 = vsel %vm252, %v251, %v249
        %v255 = vsel %vm200, %v253, %v247
        %v256 = vsel %vm201, %v254, %v246
        %v257 = vsel %vm202, %v247, %v253
        %v258 = vsel %vm203, %v246, %v254
        %vm259 = vcmask 64512
        %v261 = vsel %vm259, %v205, 0
        %263 = vmatprep.subr.mxu0 %v238
        %264 = vmatpush1.msra.mxu0 %v237
        %265 = vmatprep.subr.mxu0 0.0
        %266 = vmatpush1.msra.mxu0 0.0
        %267 = vmatprep.subr.mxu0 0.0
        %268 = vmatpush1.msra.mxu0 0.0
        %269 = vmatprep.subr.mxu0 0.0
        %270 = vmatpush1.msra.mxu0 0.0
        %271 = vmatprep.subr.mxu0 0.0
        %272 = vmatpush1.msra.mxu0 0.0
        %273 = vmatprep.subr.mxu0 0.0
        %274 = vmatpush1.msra.mxu0 0.0
        %275 = vmatprep.subr.mxu0 0.0
        %276 = vmatpush1.msra.mxu0 0.0
        %277 = vmatprep.subr.mxu0 0.0
        %278 = vmatpush1.msra.mxu0 0.0
        %279 = vmatprep.subr.mxu0 0.0
        %280 = vmatpush1.msra.mxu0 0.0
        %281 = vmatprep.subr.mxu0 0.0
        %282 = vmatpush1.msra.mxu0 0.0
        %283 = vmatprep.subr.mxu0 0.0
        %284 = vmatpush1.msra.mxu0 0.0
        %285 = vmatprep.subr.mxu0 0.0
        %286 = vmatpush1.msra.mxu0 0.0
        %287 = vmatprep.subr.mxu0 0.0
        %288 = vmatpush1.msra.mxu0 0.0
        %289 = vmatprep.subr.mxu0 0.0
        %290 = vmatpush1.msra.mxu0 0.0
        %291 = vmatprep.subr.mxu0 0.0
        %292 = vmatpush1.msra.mxu0 0.0
        %293 = vmatprep.subr.mxu0 0.0
        %294 = vmatpush1.msra.mxu0 0.0
        %295 = vmatprep.subr.mxu0 0.0
        %296 = vmatpush1.msra.mxu0 0.0
        %297 = vmatprep.subr.mxu0 0.0
        %298 = vmatpush1.msra.mxu0 0.0
        %299 = vmatprep.subr.mxu0 0.0
        %300 = vmatpush1.msra.mxu0 0.0
        %301 = vmatprep.subr.mxu0 0.0
        %302 = vmatpush1.msra.mxu0 0.0
        %303 = vmatprep.subr.mxu0 0.0
        %304 = vmatpush1.msra.mxu0 0.0
        %305 = vmatprep.subr.mxu0 0.0
        %306 = vmatpush1.msra.mxu0 0.0
        %307 = vmatprep.subr.mxu0 0.0
        %308 = vmatpush1.msra.mxu0 0.0
        %309 = vmatprep.subr.mxu0 0.0
        %310 = vmatpush1.msra.mxu0 0.0
        %311 = vmatprep.subr.mxu0 0.0
        %312 = vmatpush1.msra.mxu0 0.0
        %313 = vmatprep.subr.mxu0 0.0
        %314 = vmatpush1.msra.mxu0 0.0
        %315 = vmatprep.subr.mxu0 0.0
        %316 = vmatpush1.msra.mxu0 0.0
        %317 = vmatprep.subr.mxu0 0.0
        %318 = vmatpush1.msra.mxu0 0.0
        %319 = vmatprep.subr.mxu0 0.0
        %320 = vmatpush1.msra.mxu0 0.0
        %321 = vmatprep.subr.mxu0 0.0
        %322 = vmatpush1.msra.mxu0 0.0
        %323 = vmatprep.subr.mxu0 0.0
        %324 = vmatpush1.msra.mxu0 0.0
        %325 = vmatprep.subr.mxu0 0.0
        %326 = vmatpush1.msra.mxu0 0.0
        %327 = vmatprep.mubr.f32.mxu0 0.0
        %328 = vmatmul.mubr.f32.gmra.mrb[0].mxu0 %v261
        %v329 = vpop.f32.mrb[0].mxu0
        %v330 = vadd.f32 0.0, %v329
        %v331 = vpop.f32.mrb[0].mxu0
        %v332 = vadd.f32 0.0, %v331
        %333 = vdwg.mxu0
        %v335 = vsel %vm259, %v204, 0
        %337 = vmatprep.subr.mxu0 %v256
        %338 = vmatpush1.msra.mxu0 %v255
        %339 = vmatprep.subr.mxu0 0.0
        %340 = vmatpush1.msra.mxu0 0.0
        %341 = vmatprep.subr.mxu0 0.0
        %342 = vmatpush1.msra.mxu0 0.0
        %343 = vmatprep.subr.mxu0 0.0
        %344 = vmatpush1.msra.mxu0 0.0
        %345 = vmatprep.subr.mxu0 0.0
        %346 = vmatpush1.msra.mxu0 0.0
        %347 = vmatprep.subr.mxu0 0.0
        %348 = vmatpush1.msra.mxu0 0.0
        %349 = vmatprep.subr.mxu0 0.0
        %350 = vmatpush1.msra.mxu0 0.0
        %351 = vmatprep.subr.mxu0 0.0
        %352 = vmatpush1.msra.mxu0 0.0
        %353 = vmatprep.subr.mxu0 0.0
        %354 = vmatpush1.msra.mxu0 0.0
        %355 = vmatprep.subr.mxu0 0.0
        %356 = vmatpush1.msra.mxu0 0.0
        %357 = vmatprep.subr.mxu0 0.0
        %358 = vmatpush1.msra.mxu0 0.0
        %359 = vmatprep.subr.mxu0 0.0
        %360 = vmatpush1.msra.mxu0 0.0
        %361 = vmatprep.subr.mxu0 0.0
        %362 = vmatpush1.msra.mxu0 0.0
        %363 = vmatprep.subr.mxu0 0.0
        %364 = vmatpush1.msra.mxu0 0.0
        %365 = vmatprep.subr.mxu0 0.0
        %366 = vmatpush1.msra.mxu0 0.0
        %367 = vmatprep.subr.mxu0 0.0
        %368 = vmatpush1.msra.mxu0 0.0
        %369 = vmatprep.subr.mxu0 0.0
        %370 = vmatpush1.msra.mxu0 0.0
        %371 = vmatprep.subr.mxu0 0.0
        %372 = vmatpush1.msra.mxu0 0.0
        %373 = vmatprep.subr.mxu0 0.0
        %374 = vmatpush1.msra.mxu0 0.0
        %375 = vmatprep.subr.mxu0 0.0
        %376 = vmatpush1.msra.mxu0 0.0
        %377 = vmatprep.subr.mxu0 0.0
        %378 = vmatpush1.msra.mxu0 0.0
        %379 = vmatprep.subr.mxu0 0.0
        %380 = vmatpush1.msra.mxu0 0.0
        %381 = vmatprep.subr.mxu0 0.0
        %382 = vmatpush1.msra.mxu0 0.0
        %383 = vmatprep.subr.mxu0 0.0
        %384 = vmatpush1.msra.mxu0 0.0
        %385 = vmatprep.subr.mxu0 0.0
        %386 = vmatpush1.msra.mxu0 0.0
        %387 = vmatprep.subr.mxu0 0.0
        %388 = vmatpush1.msra.mxu0 0.0
        %389 = vmatprep.subr.mxu0 0.0
        %390 = vmatpush1.msra.mxu0 0.0
        %391 = vmatprep.subr.mxu0 0.0
        %392 = vmatpush1.msra.mxu0 0.0
        %393 = vmatprep.subr.mxu0 0.0
        %394 = vmatpush1.msra.mxu0 0.0
        %395 = vmatprep.subr.mxu0 0.0
        %396 = vmatpush1.msra.mxu0 0.0
        %397 = vmatprep.subr.mxu0 0.0
        %398 = vmatpush1.msra.mxu0 0.0
        %399 = vmatprep.subr.mxu0 0.0
        %400 = vmatpush1.msra.mxu0 0.0
        %401 = vmatprep.mubr.f32.mxu0 0.0
        %402 = vmatmul.mubr.f32.gmra.mrb[0].mxu0 %v335
        %v403 = vpop.f32.mrb[0].mxu0
        %v404 = vadd.f32 %v330, %v403
        %v405 = vpop.f32.mrb[0].mxu0
        %v406 = vadd.f32 %v332, %v405
        %407 = vdwg.mxu0
        %v409 = vsel %vm259, %v206, 0
        %411 = vmatprep.subr.mxu0 %v258
        %412 = vmatpush1.msra.mxu0 %v257
        %413 = vmatprep.subr.mxu0 0.0
        %414 = vmatpush1.msra.mxu0 0.0
        %415 = vmatprep.subr.mxu0 0.0
        %416 = vmatpush1.msra.mxu0 0.0
        %417 = vmatprep.subr.mxu0 0.0
        %418 = vmatpush1.msra.mxu0 0.0
        %419 = vmatprep.subr.mxu0 0.0
        %420 = vmatpush1.msra.mxu0 0.0
        %421 = vmatprep.subr.mxu0 0.0
        %422 = vmatpush1.msra.mxu0 0.0
        %423 = vmatprep.subr.mxu0 0.0
        %424 = vmatpush1.msra.mxu0 0.0
        %425 = vmatprep.subr.mxu0 0.0
        %426 = vmatpush1.msra.mxu0 0.0
        %427 = vmatprep.subr.mxu0 0.0
        %428 = vmatpush1.msra.mxu0 0.0
        %429 = vmatprep.subr.mxu0 0.0
        %430 = vmatpush1.msra.mxu0 0.0
        %431 = vmatprep.subr.mxu0 0.0
        %432 = vmatpush1.msra.mxu0 0.0
        %433 = vmatprep.subr.mxu0 0.0
        %434 = vmatpush1.msra.mxu0 0.0
        %435 = vmatprep.subr.mxu0 0.0
        %436 = vmatpush1.msra.mxu0 0.0
        %437 = vmatprep.subr.mxu0 0.0
        %438 = vmatpush1.msra.mxu0 0.0
        %439 = vmatprep.subr.mxu0 0.0
        %440 = vmatpush1.msra.mxu0 0.0
        %441 = vmatprep.subr.mxu0 0.0
        %442 = vmatpush1.msra.mxu0 0.0
        %443 = vmatprep.subr.mxu0 0.0
        %444 = vmatpush1.msra.mxu0 0.0
        %445 = vmatprep.subr.mxu0 0.0
        %446 = vmatpush1.msra.mxu0 0.0
        %447 = vmatprep.subr.mxu0 0.0
        %448 = vmatpush1.msra.mxu0 0.0
        %449 = vmatprep.subr.mxu0 0.0
        %450 = vmatpush1.msra.mxu0 0.0
        %451 = vmatprep.subr.mxu0 0.0
        %452 = vmatpush1.msra.mxu0 0.0
        %453 = vmatprep.subr.mxu0 0.0
        %454 = vmatpush1.msra.mxu0 0.0
        %455 = vmatprep.subr.mxu0 0.0
        %456 = vmatpush1.msra.mxu0 0.0
        %457 = vmatprep.subr.mxu0 0.0
        %458 = vmatpush1.msra.mxu0 0.0
        %459 = vmatprep.subr.mxu0 0.0
        %460 = vmatpush1.msra.mxu0 0.0
        %461 = vmatprep.subr.mxu0 0.0
        %462 = vmatpush1.msra.mxu0 0.0
        %463 = vmatprep.subr.mxu0 0.0
        %464 = vmatpush1.msra.mxu0 0.0
        %465 = vmatprep.subr.mxu0 0.0
        %466 = vmatpush1.msra.mxu0 0.0
        %467 = vmatprep.subr.mxu0 0.0
        %468 = vmatpush1.msra.mxu0 0.0
        %469 = vmatprep.subr.mxu0 0.0
        %470 = vmatpush1.msra.mxu0 0.0
        %471 = vmatprep.subr.mxu0 0.0
        %472 = vmatpush1.msra.mxu0 0.0
        %473 = vmatprep.subr.mxu0 0.0
        %474 = vmatpush1.msra.mxu0 0.0
        %475 = vmatprep.mubr.f32.mxu0 0.0
        %476 = vmatmul.mubr.f32.gmra.mrb[0].mxu0 %v409
        %v477 = vpop.f32.mrb[0].mxu0
        %v478 = vadd.f32 0.0, %v477
        %v479 = vpop.f32.mrb[0].mxu0
        %v480 = vadd.f32 0.0, %v479
        %481 = vdwg.mxu0
        %v482 = vadd.f32 %v404, %v478
        %v483 = vadd.f32 %v406, %v480
        %484 = vrot.lane.b32.xlu0 %v222, 1
        %v485 = vpop.permute.xlu0 %484
        %486 = vrot.lane.b32.xlu0 %v223, 1
        %v487 = vpop.permute.xlu0 %486
        %v488 = vsel %vm245, %v485, %v487
        %v489 = vsel %vm245, %v487, %v485
        %490 = vrot.lane.b32.xlu0 %v222, 127
        %v491 = vpop.permute.xlu0 %490
        %492 = vrot.lane.b32.xlu0 %v223, 127
        %v493 = vpop.permute.xlu0 %492
        %v494 = vsel %vm252, %v491, %v493
        %v495 = vsel %vm252, %v493, %v491
        %v496 = vsel %vm200, %v494, %v489
        %v497 = vsel %vm201, %v495, %v488
        %v498 = vsel %vm202, %v489, %v494
        %v499 = vsel %vm203, %v488, %v495
        %v501 = vsel %vm259, %v207, 0
        %503 = vmatprep.subr.mxu0 %v497
        %504 = vmatpush1.msra.mxu0 %v496
        %505 = vmatprep.subr.mxu0 0.0
        %506 = vmatpush1.msra.mxu0 0.0
        %507 = vmatprep.subr.mxu0 0.0
        %508 = vmatpush1.msra.mxu0 0.0
        %509 = vmatprep.subr.mxu0 0.0
        %510 = vmatpush1.msra.mxu0 0.0
        %511 = vmatprep.subr.mxu0 0.0
        %512 = vmatpush1.msra.mxu0 0.0
        %513 = vmatprep.subr.mxu0 0.0
        %514 = vmatpush1.msra.mxu0 0.0
        %515 = vmatprep.subr.mxu0 0.0
        %516 = vmatpush1.msra.mxu0 0.0
        %517 = vmatprep.subr.mxu0 0.0
        %518 = vmatpush1.msra.mxu0 0.0
        %519 = vmatprep.subr.mxu0 0.0
        %520 = vmatpush1.msra.mxu0 0.0
        %521 = vmatprep.subr.mxu0 0.0
        %522 = vmatpush1.msra.mxu0 0.0
        %523 = vmatprep.subr.mxu0 0.0
        %524 = vmatpush1.msra.mxu0 0.0
        %525 = vmatprep.subr.mxu0 0.0
        %526 = vmatpush1.msra.mxu0 0.0
        %527 = vmatprep.subr.mxu0 0.0
        %528 = vmatpush1.msra.mxu0 0.0
        %529 = vmatprep.subr.mxu0 0.0
        %530 = vmatpush1.msra.mxu0 0.0
        %531 = vmatprep.subr.mxu0 0.0
        %532 = vmatpush1.msra.mxu0 0.0
        %533 = vmatprep.subr.mxu0 0.0
        %534 = vmatpush1.msra.mxu0 0.0
        %535 = vmatprep.subr.mxu0 0.0
        %536 = vmatpush1.msra.mxu0 0.0
        %537 = vmatprep.subr.mxu0 0.0
        %538 = vmatpush1.msra.mxu0 0.0
        %539 = vmatprep.subr.mxu0 0.0
        %540 = vmatpush1.msra.mxu0 0.0
        %541 = vmatprep.subr.mxu0 0.0
        %542 = vmatpush1.msra.mxu0 0.0
        %543 = vmatprep.subr.mxu0 0.0
        %544 = vmatpush1.msra.mxu0 0.0
        %545 = vmatprep.subr.mxu0 0.0
        %546 = vmatpush1.msra.mxu0 0.0
        %547 = vmatprep.subr.mxu0 0.0
        %548 = vmatpush1.msra.mxu0 0.0
        %549 = vmatprep.subr.mxu0 0.0
        %550 = vmatpush1.msra.mxu0 0.0
        %551 = vmatprep.subr.mxu0 0.0
        %552 = vmatpush1.msra.mxu0 0.0
        %553 = vmatprep.subr.mxu0 0.0
        %554 = vmatpush1.msra.mxu0 0.0
        %555 = vmatprep.subr.mxu0 0.0
        %556 = vmatpush1.msra.mxu0 0.0
        %557 = vmatprep.subr.mxu0 0.0
        %558 = vmatpush1.msra.mxu0 0.0
        %559 = vmatprep.subr.mxu0 0.0
        %560 = vmatpush1.msra.mxu0 0.0
        %561 = vmatprep.subr.mxu0 0.0
        %562 = vmatpush1.msra.mxu0 0.0
        %563 = vmatprep.subr.mxu0 0.0
        %564 = vmatpush1.msra.mxu0 0.0
        %565 = vmatprep.subr.mxu0 0.0
        %566 = vmatpush1.msra.mxu0 0.0
        %567 = vmatprep.mubr.f32.mxu0 0.0
        %568 = vmatmul.mubr.f32.gmra.mrb[0].mxu0 %v501
        %v569 = vpop.f32.mrb[0].mxu0
        %v570 = vadd.f32 0.0, %v569
        %v571 = vpop.f32.mrb[0].mxu0
        %v572 = vadd.f32 0.0, %v571
        %573 = vdwg.mxu0
        %v574 = vadd.f32 %v482, %v570
        %v575 = vadd.f32 %v483, %v572
        %v577 = vsel %vm259, %v208, 0
        %579 = vmatprep.subr.mxu0 %v223
        %580 = vmatpush1.msra.mxu0 %v222
        %581 = vmatprep.subr.mxu0 0.0
        %582 = vmatpush1.msra.mxu0 0.0
        %583 = vmatprep.subr.mxu0 0.0
        %584 = vmatpush1.msra.mxu0 0.0
        %585 = vmatprep.subr.mxu0 0.0
        %586 = vmatpush1.msra.mxu0 0.0
        %587 = vmatprep.subr.mxu0 0.0
        %588 = vmatpush1.msra.mxu0 0.0
        %589 = vmatprep.subr.mxu0 0.0
        %590 = vmatpush1.msra.mxu0 0.0
        %591 = vmatprep.subr.mxu0 0.0
        %592 = vmatpush1.msra.mxu0 0.0
        %593 = vmatprep.subr.mxu0 0.0
        %594 = vmatpush1.msra.mxu0 0.0
        %595 = vmatprep.subr.mxu0 0.0
        %596 = vmatpush1.msra.mxu0 0.0
        %597 = vmatprep.subr.mxu0 0.0
        %598 = vmatpush1.msra.mxu0 0.0
        %599 = vmatprep.subr.mxu0 0.0
        %600 = vmatpush1.msra.mxu0 0.0
        %601 = vmatprep.subr.mxu0 0.0
        %602 = vmatpush1.msra.mxu0 0.0
        %603 = vmatprep.subr.mxu0 0.0
        %604 = vmatpush1.msra.mxu0 0.0
        %605 = vmatprep.subr.mxu0 0.0
        %606 = vmatpush1.msra.mxu0 0.0
        %607 = vmatprep.subr.mxu0 0.0
        %608 = vmatpush1.msra.mxu0 0.0
        %609 = vmatprep.subr.mxu0 0.0
        %610 = vmatpush1.msra.mxu0 0.0
        %611 = vmatprep.subr.mxu0 0.0
        %612 = vmatpush1.msra.mxu0 0.0
        %613 = vmatprep.subr.mxu0 0.0
        %614 = vmatpush1.msra.mxu0 0.0
        %615 = vmatprep.subr.mxu0 0.0
        %616 = vmatpush1.msra.mxu0 0.0
        %617 = vmatprep.subr.mxu0 0.0
        %618 = vmatpush1.msra.mxu0 0.0
        %619 = vmatprep.subr.mxu0 0.0
        %620 = vmatpush1.msra.mxu0 0.0
        %621 = vmatprep.subr.mxu0 0.0
        %622 = vmatpush1.msra.mxu0 0.0
        %623 = vmatprep.subr.mxu0 0.0
        %624 = vmatpush1.msra.mxu0 0.0
        %625 = vmatprep.subr.mxu0 0.0
        %626 = vmatpush1.msra.mxu0 0.0
        %627 = vmatprep.subr.mxu0 0.0
        %628 = vmatpush1.msra.mxu0 0.0
        %629 = vmatprep.subr.mxu0 0.0
        %630 = vmatpush1.msra.mxu0 0.0
        %631 = vmatprep.subr.mxu0 0.0
        %632 = vmatpush1.msra.mxu0 0.0
        %633 = vmatprep.subr.mxu0 0.0
        %634 = vmatpush1.msra.mxu0 0.0
        %635 = vmatprep.subr.mxu0 0.0
        %636 = vmatpush1.msra.mxu0 0.0
        %637 = vmatprep.subr.mxu0 0.0
        %638 = vmatpush1.msra.mxu0 0.0
        %639 = vmatprep.subr.mxu0 0.0
        %640 = vmatpush1.msra.mxu0 0.0
        %641 = vmatprep.subr.mxu0 0.0
        %642 = vmatpush1.msra.mxu0 0.0
        %643 = vmatprep.mubr.f32.mxu0 0.0
        %644 = vmatmul.mubr.f32.gmra.mrb[0].mxu0 %v577
        %v645 = vpop.f32.mrb[0].mxu0
        %v646 = vadd.f32 0.0, %v645
        %v647 = vpop.f32.mrb[0].mxu0
        %v648 = vadd.f32 0.0, %v647
        %649 = vdwg.mxu0
        %v650 = vadd.f32 %v574, %v646
        %v651 = vadd.f32 %v575, %v648
        %v653 = vsel %vm259, %v209, 0
        %655 = vmatprep.subr.mxu0 %v499
        %656 = vmatpush1.msra.mxu0 %v498
        %657 = vmatprep.subr.mxu0 0.0
        %658 = vmatpush1.msra.mxu0 0.0
        %659 = vmatprep.subr.mxu0 0.0
        %660 = vmatpush1.msra.mxu0 0.0
        %661 = vmatprep.subr.mxu0 0.0
        %662 = vmatpush1.msra.mxu0 0.0
        %663 = vmatprep.subr.mxu0 0.0
        %664 = vmatpush1.msra.mxu0 0.0
        %665 = vmatprep.subr.mxu0 0.0
        %666 = vmatpush1.msra.mxu0 0.0
        %667 = vmatprep.subr.mxu0 0.0
        %668 = vmatpush1.msra.mxu0 0.0
        %669 = vmatprep.subr.mxu0 0.0
        %670 = vmatpush1.msra.mxu0 0.0
        %671 = vmatprep.subr.mxu0 0.0
        %672 = vmatpush1.msra.mxu0 0.0
        %673 = vmatprep.subr.mxu0 0.0
        %674 = vmatpush1.msra.mxu0 0.0
        %675 = vmatprep.subr.mxu0 0.0
        %676 = vmatpush1.msra.mxu0 0.0
        %677 = vmatprep.subr.mxu0 0.0
        %678 = vmatpush1.msra.mxu0 0.0
        %679 = vmatprep.subr.mxu0 0.0
        %680 = vmatpush1.msra.mxu0 0.0
        %681 = vmatprep.subr.mxu0 0.0
        %682 = vmatpush1.msra.mxu0 0.0
        %683 = vmatprep.subr.mxu0 0.0
        %684 = vmatpush1.msra.mxu0 0.0
        %685 = vmatprep.subr.mxu0 0.0
        %686 = vmatpush1.msra.mxu0 0.0
        %687 = vmatprep.subr.mxu0 0.0
        %688 = vmatpush1.msra.mxu0 0.0
        %689 = vmatprep.subr.mxu0 0.0
        %690 = vmatpush1.msra.mxu0 0.0
        %691 = vmatprep.subr.mxu0 0.0
        %692 = vmatpush1.msra.mxu0 0.0
        %693 = vmatprep.subr.mxu0 0.0
        %694 = vmatpush1.msra.mxu0 0.0
        %695 = vmatprep.subr.mxu0 0.0
        %696 = vmatpush1.msra.mxu0 0.0
        %697 = vmatprep.subr.mxu0 0.0
        %698 = vmatpush1.msra.mxu0 0.0
        %699 = vmatprep.subr.mxu0 0.0
        %700 = vmatpush1.msra.mxu0 0.0
        %701 = vmatprep.subr.mxu0 0.0
        %702 = vmatpush1.msra.mxu0 0.0
        %703 = vmatprep.subr.mxu0 0.0
        %704 = vmatpush1.msra.mxu0 0.0
        %705 = vmatprep.subr.mxu0 0.0
        %706 = vmatpush1.msra.mxu0 0.0
        %707 = vmatprep.subr.mxu0 0.0
        %708 = vmatpush1.msra.mxu0 0.0
        %709 = vmatprep.subr.mxu0 0.0
        %710 = vmatpush1.msra.mxu0 0.0
        %711 = vmatprep.subr.mxu0 0.0
        %712 = vmatpush1.msra.mxu0 0.0
        %713 = vmatprep.subr.mxu0 0.0
        %714 = vmatpush1.msra.mxu0 0.0
        %715 = vmatprep.subr.mxu0 0.0
        %716 = vmatpush1.msra.mxu0 0.0
        %717 = vmatprep.subr.mxu0 0.0
        %718 = vmatpush1.msra.mxu0 0.0
        %719 = vmatprep.mubr.f32.mxu0 0.0
        %720 = vmatmul.mubr.f32.gmra.mrb[0].mxu0 %v653
        %v721 = vpop.f32.mrb[0].mxu0
        %v722 = vadd.f32 0.0, %v721
        %v723 = vpop.f32.mrb[0].mxu0
        %v724 = vadd.f32 0.0, %v723
        %725 = vdwg.mxu0
        %v726 = vadd.f32 %v650, %v722
        %v727 = vadd.f32 %v651, %v724
        %728 = vrot.lane.b32.xlu0 %v239, 1
        %v729 = vpop.permute.xlu0 %728
        %730 = vrot.lane.b32.xlu0 %v240, 1
        %v731 = vpop.permute.xlu0 %730
        %v732 = vsel %vm245, %v729, %v731
        %v733 = vsel %vm245, %v731, %v729
        %734 = vrot.lane.b32.xlu0 %v239, 127
        %v735 = vpop.permute.xlu0 %734
        %736 = vrot.lane.b32.xlu0 %v240, 127
        %v737 = vpop.permute.xlu0 %736
        %v738 = vsel %vm252, %v735, %v737
        %v739 = vsel %vm252, %v737, %v735
        %v740 = vsel %vm200, %v738, %v733
        %v741 = vsel %vm201, %v739, %v732
        %v742 = vsel %vm202, %v733, %v738
        %v743 = vsel %vm203, %v732, %v739
        %v745 = vsel %vm259, %v210, 0
        %747 = vmatprep.subr.mxu0 %v741
        %748 = vmatpush1.msra.mxu0 %v740
        %749 = vmatprep.subr.mxu0 0.0
        %750 = vmatpush1.msra.mxu0 0.0
        %751 = vmatprep.subr.mxu0 0.0
        %752 = vmatpush1.msra.mxu0 0.0
        %753 = vmatprep.subr.mxu0 0.0
        %754 = vmatpush1.msra.mxu0 0.0
        %755 = vmatprep.subr.mxu0 0.0
        %756 = vmatpush1.msra.mxu0 0.0
        %757 = vmatprep.subr.mxu0 0.0
        %758 = vmatpush1.msra.mxu0 0.0
        %759 = vmatprep.subr.mxu0 0.0
        %760 = vmatpush1.msra.mxu0 0.0
        %761 = vmatprep.subr.mxu0 0.0
        %762 = vmatpush1.msra.mxu0 0.0
        %763 = vmatprep.subr.mxu0 0.0
        %764 = vmatpush1.msra.mxu0 0.0
        %765 = vmatprep.subr.mxu0 0.0
        %766 = vmatpush1.msra.mxu0 0.0
        %767 = vmatprep.subr.mxu0 0.0
        %768 = vmatpush1.msra.mxu0 0.0
        %769 = vmatprep.subr.mxu0 0.0
        %770 = vmatpush1.msra.mxu0 0.0
        %771 = vmatprep.subr.mxu0 0.0
        %772 = vmatpush1.msra.mxu0 0.0
        %773 = vmatprep.subr.mxu0 0.0
        %774 = vmatpush1.msra.mxu0 0.0
        %775 = vmatprep.subr.mxu0 0.0
        %776 = vmatpush1.msra.mxu0 0.0
        %777 = vmatprep.subr.mxu0 0.0
        %778 = vmatpush1.msra.mxu0 0.0
        %779 = vmatprep.subr.mxu0 0.0
        %780 = vmatpush1.msra.mxu0 0.0
        %781 = vmatprep.subr.mxu0 0.0
        %782 = vmatpush1.msra.mxu0 0.0
        %783 = vmatprep.subr.mxu0 0.0
        %784 = vmatpush1.msra.mxu0 0.0
        %785 = vmatprep.subr.mxu0 0.0
        %786 = vmatpush1.msra.mxu0 0.0
        %787 = vmatprep.subr.mxu0 0.0
        %788 = vmatpush1.msra.mxu0 0.0
        %789 = vmatprep.subr.mxu0 0.0
        %790 = vmatpush1.msra.mxu0 0.0
        %791 = vmatprep.subr.mxu0 0.0
        %792 = vmatpush1.msra.mxu0 0.0
        %793 = vmatprep.subr.mxu0 0.0
        %794 = vmatpush1.msra.mxu0 0.0
        %795 = vmatprep.subr.mxu0 0.0
        %796 = vmatpush1.msra.mxu0 0.0
        %797 = vmatprep.subr.mxu0 0.0
        %798 = vmatpush1.msra.mxu0 0.0
        %799 = vmatprep.subr.mxu0 0.0
        %800 = vmatpush1.msra.mxu0 0.0
        %801 = vmatprep.subr.mxu0 0.0
        %802 = vmatpush1.msra.mxu0 0.0
        %803 = vmatprep.subr.mxu0 0.0
        %804 = vmatpush1.msra.mxu0 0.0
        %805 = vmatprep.subr.mxu0 0.0
        %806 = vmatpush1.msra.mxu0 0.0
        %807 = vmatprep.subr.mxu0 0.0
        %808 = vmatpush1.msra.mxu0 0.0
        %809 = vmatprep.subr.mxu0 0.0
        %810 = vmatpush1.msra.mxu0 0.0
        %811 = vmatprep.mubr.f32.mxu0 0.0
        %812 = vmatmul.mubr.f32.gmra.mrb[0].mxu0 %v745
        %v813 = vpop.f32.mrb[0].mxu0
        %v814 = vadd.f32 0.0, %v813
        %v815 = vpop.f32.mrb[0].mxu0
        %v816 = vadd.f32 0.0, %v815
        %817 = vdwg.mxu0
        %v818 = vadd.f32 %v726, %v814
        %v819 = vadd.f32 %v727, %v816
        %v821 = vsel %vm259, %v211, 0
        %823 = vmatprep.subr.mxu0 %v240
        %824 = vmatpush1.msra.mxu0 %v239
        %825 = vmatprep.subr.mxu0 0.0
        %826 = vmatpush1.msra.mxu0 0.0
        %827 = vmatprep.subr.mxu0 0.0
        %828 = vmatpush1.msra.mxu0 0.0
        %829 = vmatprep.subr.mxu0 0.0
        %830 = vmatpush1.msra.mxu0 0.0
        %831 = vmatprep.subr.mxu0 0.0
        %832 = vmatpush1.msra.mxu0 0.0
        %833 = vmatprep.subr.mxu0 0.0
        %834 = vmatpush1.msra.mxu0 0.0
        %835 = vmatprep.subr.mxu0 0.0
        %836 = vmatpush1.msra.mxu0 0.0
        %837 = vmatprep.subr.mxu0 0.0
        %838 = vmatpush1.msra.mxu0 0.0
        %839 = vmatprep.subr.mxu0 0.0
        %840 = vmatpush1.msra.mxu0 0.0
        %841 = vmatprep.subr.mxu0 0.0
        %842 = vmatpush1.msra.mxu0 0.0
        %843 = vmatprep.subr.mxu0 0.0
        %844 = vmatpush1.msra.mxu0 0.0
        %845 = vmatprep.subr.mxu0 0.0
        %846 = vmatpush1.msra.mxu0 0.0
        %847 = vmatprep.subr.mxu0 0.0
        %848 = vmatpush1.msra.mxu0 0.0
        %849 = vmatprep.subr.mxu0 0.0
        %850 = vmatpush1.msra.mxu0 0.0
        %851 = vmatprep.subr.mxu0 0.0
        %852 = vmatpush1.msra.mxu0 0.0
        %853 = vmatprep.subr.mxu0 0.0
        %854 = vmatpush1.msra.mxu0 0.0
        %855 = vmatprep.subr.mxu0 0.0
        %856 = vmatpush1.msra.mxu0 0.0
        %857 = vmatprep.subr.mxu0 0.0
        %858 = vmatpush1.msra.mxu0 0.0
        %859 = vmatprep.subr.mxu0 0.0
        %860 = vmatpush1.msra.mxu0 0.0
        %861 = vmatprep.subr.mxu0 0.0
        %862 = vmatpush1.msra.mxu0 0.0
        %863 = vmatprep.subr.mxu0 0.0
        %864 = vmatpush1.msra.mxu0 0.0
        %865 = vmatprep.subr.mxu0 0.0
        %866 = vmatpush1.msra.mxu0 0.0
        %867 = vmatprep.subr.mxu0 0.0
        %868 = vmatpush1.msra.mxu0 0.0
        %869 = vmatprep.subr.mxu0 0.0
        %870 = vmatpush1.msra.mxu0 0.0
        %871 = vmatprep.subr.mxu0 0.0
        %872 = vmatpush1.msra.mxu0 0.0
        %873 = vmatprep.subr.mxu0 0.0
        %874 = vmatpush1.msra.mxu0 0.0
        %875 = vmatprep.subr.mxu0 0.0
        %876 = vmatpush1.msra.mxu0 0.0
        %877 = vmatprep.subr.mxu0 0.0
        %878 = vmatpush1.msra.mxu0 0.0
        %879 = vmatprep.subr.mxu0 0.0
        %880 = vmatpush1.msra.mxu0 0.0
        %881 = vmatprep.subr.mxu0 0.0
        %882 = vmatpush1.msra.mxu0 0.0
        %883 = vmatprep.subr.mxu0 0.0
        %884 = vmatpush1.msra.mxu0 0.0
        %885 = vmatprep.subr.mxu0 0.0
        %886 = vmatpush1.msra.mxu0 0.0
        %887 = vmatprep.mubr.f32.mxu0 0.0
        %888 = vmatmul.mubr.f32.gmra.mrb[0].mxu0 %v821
        %v889 = vpop.f32.mrb[0].mxu0
        %v890 = vadd.f32 0.0, %v889
        %v891 = vpop.f32.mrb[0].mxu0
        %v892 = vadd.f32 0.0, %v891
        %893 = vdwg.mxu0
        %v894 = vadd.f32 %v818, %v890
        %v895 = vadd.f32 %v819, %v892
        %v897 = vsel %vm259, %v212, 0
        %899 = vmatprep.subr.mxu0 %v743
        %900 = vmatpush1.msra.mxu0 %v742
        %901 = vmatprep.subr.mxu0 0.0
        %902 = vmatpush1.msra.mxu0 0.0
        %903 = vmatprep.subr.mxu0 0.0
        %904 = vmatpush1.msra.mxu0 0.0
        %905 = vmatprep.subr.mxu0 0.0
        %906 = vmatpush1.msra.mxu0 0.0
        %907 = vmatprep.subr.mxu0 0.0
        %908 = vmatpush1.msra.mxu0 0.0
        %909 = vmatprep.subr.mxu0 0.0
        %910 = vmatpush1.msra.mxu0 0.0
        %911 = vmatprep.subr.mxu0 0.0
        %912 = vmatpush1.msra.mxu0 0.0
        %913 = vmatprep.subr.mxu0 0.0
        %914 = vmatpush1.msra.mxu0 0.0
        %915 = vmatprep.subr.mxu0 0.0
        %916 = vmatpush1.msra.mxu0 0.0
        %917 = vmatprep.subr.mxu0 0.0
        %918 = vmatpush1.msra.mxu0 0.0
        %919 = vmatprep.subr.mxu0 0.0
        %920 = vmatpush1.msra.mxu0 0.0
        %921 = vmatprep.subr.mxu0 0.0
        %922 = vmatpush1.msra.mxu0 0.0
        %923 = vmatprep.subr.mxu0 0.0
        %924 = vmatpush1.msra.mxu0 0.0
        %925 = vmatprep.subr.mxu0 0.0
        %926 = vmatpush1.msra.mxu0 0.0
        %927 = vmatprep.subr.mxu0 0.0
        %928 = vmatpush1.msra.mxu0 0.0
        %929 = vmatprep.subr.mxu0 0.0
        %930 = vmatpush1.msra.mxu0 0.0
        %931 = vmatprep.subr.mxu0 0.0
        %932 = vmatpush1.msra.mxu0 0.0
        %933 = vmatprep.subr.mxu0 0.0
        %934 = vmatpush1.msra.mxu0 0.0
        %935 = vmatprep.subr.mxu0 0.0
        %936 = vmatpush1.msra.mxu0 0.0
        %937 = vmatprep.subr.mxu0 0.0
        %938 = vmatpush1.msra.mxu0 0.0
        %939 = vmatprep.subr.mxu0 0.0
        %940 = vmatpush1.msra.mxu0 0.0
        %941 = vmatprep.subr.mxu0 0.0
        %942 = vmatpush1.msra.mxu0 0.0
        %943 = vmatprep.subr.mxu0 0.0
        %944 = vmatpush1.msra.mxu0 0.0
        %945 = vmatprep.subr.mxu0 0.0
        %946 = vmatpush1.msra.mxu0 0.0
        %947 = vmatprep.subr.mxu0 0.0
        %948 = vmatpush1.msra.mxu0 0.0
        %949 = vmatprep.subr.mxu0 0.0
        %950 = vmatpush1.msra.mxu0 0.0
        %951 = vmatprep.subr.mxu0 0.0
        %952 = vmatpush1.msra.mxu0 0.0
        %953 = vmatprep.subr.mxu0 0.0
        %954 = vmatpush1.msra.mxu0 0.0
        %955 = vmatprep.subr.mxu0 0.0
        %956 = vmatpush1.msra.mxu0 0.0
        %957 = vmatprep.subr.mxu0 0.0
        %958 = vmatpush1.msra.mxu0 0.0
        %959 = vmatprep.subr.mxu0 0.0
        %960 = vmatpush1.msra.mxu0 0.0
        %961 = vmatprep.subr.mxu0 0.0
        %962 = vmatpush1.msra.mxu0 0.0
        %963 = vmatprep.mubr.f32.mxu0 0.0
        %964 = vmatmul.mubr.f32.gmra.mrb[0].mxu0 %v897
        %v965 = vpop.f32.mrb[0].mxu0
        %v966 = vadd.f32 0.0, %v965
        %v967 = vpop.f32.mrb[0].mxu0
        %v968 = vadd.f32 0.0, %v967
        %969 = vdwg.mxu0
        %v970 = vadd.f32 %v894, %v966
        %v971 = vadd.f32 %v895, %v968
        %v972 = vadd.f32 %v970, %v971
        %973 = vadd.xlane.f32.xlu0 %v972
        %v974 = vpop.xlane.xlu0 %973
        %v975 = vmul.f32 %v970, %v970
        %v976 = vmul.f32 %v971, %v971
        %v977 = vadd.f32 %v975, %v976
        %978 = vadd.xlane.f32.xlu0 %v977
        %v979 = vpop.xlane.xlu0 %978
        %v980 = vmul.f32 %v974, 0.00390625
        %v981 = vmul.f32 %v979, 0.00390625
        %v982 = vmul.f32 %v980, %v980
        %v983 = vsub.f32 %v981, %v982
        %v984 = vmax.f32 %v983, 0.0
        %v985 = vsub.f32 %v970, %v980
        %v986 = vsub.f32 %v971, %v980
        %v987 = vadd.f32 %v984, 1e-05
        %v988 = vrsqrt.pop %v987
        %v989 = vmul.f32 %v985, %v988
        %v990 = vmul.f32 %v986, %v988
        %v991 = vmax.f32 %v989, 0.0
        %v992 = vmax.f32 %v990, 0.0
        %993 = vrot.lane.b32.xlu0 %v991, 16
        %v994 = vpop.permute.xlu0 %993
        %995 = vrot.lane.b32.xlu0 %v992, 16
        %v996 = vpop.permute.xlu0 %995
        %v997 = vsel %vm172, %v994, %v996
        %v998 = vsel %vm172, %v996, %v994
        %999 = vrot.lane.b32.xlu0 %v991, 112
        %v1000 = vpop.permute.xlu0 %999
        %1001 = vrot.lane.b32.xlu0 %v992, 112
        %v1002 = vpop.permute.xlu0 %1001
        %v1003 = vsel %vm234, %v1000, %v1002
        %v1004 = vsel %vm234, %v1002, %v1000
        %v1005 = vsel %vm172, %v1003, %v998
        %v1006 = vsel %vm173, %v1004, %v997
        %v1007 = vsel %vm174, %v998, %v1003
        %v1008 = vsel %vm175, %v997, %v1004
        %1009 = vrot.lane.b32.xlu0 %v1005, 1
        %v1010 = vpop.permute.xlu0 %1009
        %1011 = vrot.lane.b32.xlu0 %v1006, 1
        %v1012 = vpop.permute.xlu0 %1011
        %v1013 = vsel %vm245, %v1010, %v1012
        %v1014 = vsel %vm245, %v1012, %v1010
        %1015 = vrot.lane.b32.xlu0 %v1005, 127
        %v1016 = vpop.permute.xlu0 %1015
        %1017 = vrot.lane.b32.xlu0 %v1006, 127
        %v1018 = vpop.permute.xlu0 %1017
        %v1019 = vsel %vm252, %v1016, %v1018
        %v1020 = vsel %vm252, %v1018, %v1016
        %v1021 = vsel %vm200, %v1019, %v1014
        %v1022 = vsel %vm201, %v1020, %v1013
        %v1023 = vsel %vm202, %v1014, %v1019
        %v1024 = vsel %vm203, %v1013, %v1020
        %v1026 = vsel %vm259, %v214, 0
        %1028 = vmatprep.subr.mxu0 %v1006
        %1029 = vmatpush1.msra.mxu0 %v1005
        %1030 = vmatprep.subr.mxu0 0.0
        %1031 = vmatpush1.msra.mxu0 0.0
        %1032 = vmatprep.subr.mxu0 0.0
        %1033 = vmatpush1.msra.mxu0 0.0
        %1034 = vmatprep.subr.mxu0 0.0
        %1035 = vmatpush1.msra.mxu0 0.0
        %1036 = vmatprep.subr.mxu0 0.0
        %1037 = vmatpush1.msra.mxu0 0.0
        %1038 = vmatprep.subr.mxu0 0.0
        %1039 = vmatpush1.msra.mxu0 0.0
        %1040 = vmatprep.subr.mxu0 0.0
        %1041 = vmatpush1.msra.mxu0 0.0
        %1042 = vmatprep.subr.mxu0 0.0
        %1043 = vmatpush1.msra.mxu0 0.0
        %1044 = vmatprep.subr.mxu0 0.0
        %1045 = vmatpush1.msra.mxu0 0.0
        %1046 = vmatprep.subr.mxu0 0.0
        %1047 = vmatpush1.msra.mxu0 0.0
        %1048 = vmatprep.subr.mxu0 0.0
        %1049 = vmatpush1.msra.mxu0 0.0
        %1050 = vmatprep.subr.mxu0 0.0
        %1051 = vmatpush1.msra.mxu0 0.0
        %1052 = vmatprep.subr.mxu0 0.0
        %1053 = vmatpush1.msra.mxu0 0.0
        %1054 = vmatprep.subr.mxu0 0.0
        %1055 = vmatpush1.msra.mxu0 0.0
        %1056 = vmatprep.subr.mxu0 0.0
        %1057 = vmatpush1.msra.mxu0 0.0
        %1058 = vmatprep.subr.mxu0 0.0
        %1059 = vmatpush1.msra.mxu0 0.0
        %1060 = vmatprep.subr.mxu0 0.0
        %1061 = vmatpush1.msra.mxu0 0.0
        %1062 = vmatprep.subr.mxu0 0.0
        %1063 = vmatpush1.msra.mxu0 0.0
        %1064 = vmatprep.subr.mxu0 0.0
        %1065 = vmatpush1.msra.mxu0 0.0
        %1066 = vmatprep.subr.mxu0 0.0
        %1067 = vmatpush1.msra.mxu0 0.0
        %1068 = vmatprep.subr.mxu0 0.0
        %1069 = vmatpush1.msra.mxu0 0.0
        %1070 = vmatprep.subr.mxu0 0.0
        %1071 = vmatpush1.msra.mxu0 0.0
        %1072 = vmatprep.subr.mxu0 0.0
        %1073 = vmatpush1.msra.mxu0 0.0
        %1074 = vmatprep.subr.mxu0 0.0
        %1075 = vmatpush1.msra.mxu0 0.0
        %1076 = vmatprep.subr.mxu0 0.0
        %1077 = vmatpush1.msra.mxu0 0.0
        %1078 = vmatprep.subr.mxu0 0.0
        %1079 = vmatpush1.msra.mxu0 0.0
        %1080 = vmatprep.subr.mxu0 0.0
        %1081 = vmatpush1.msra.mxu0 0.0
        %1082 = vmatprep.subr.mxu0 0.0
        %1083 = vmatpush1.msra.mxu0 0.0
        %1084 = vmatprep.subr.mxu0 0.0
        %1085 = vmatpush1.msra.mxu0 0.0
        %1086 = vmatprep.subr.mxu0 0.0
        %1087 = vmatpush1.msra.mxu0 0.0
        %1088 = vmatprep.subr.mxu0 0.0
        %1089 = vmatpush1.msra.mxu0 0.0
        %1090 = vmatprep.subr.mxu0 0.0
        %1091 = vmatpush1.msra.mxu0 0.0
        %1092 = vmatprep.mubr.f32.mxu0 0.0
        %1093 = vmatmul.mubr.f32.gmra.mrb[0].mxu0 %v1026
        %v1094 = vpop.f32.mrb[0].mxu0
        %v1095 = vadd.f32 0.0, %v1094
        %v1096 = vpop.f32.mrb[0].mxu0
        %v1097 = vadd.f32 0.0, %v1096
        %1098 = vdwg.mxu0
        %v1100 = vsel %vm259, %v213, 0
        %1102 = vmatprep.subr.mxu0 %v1022
        %1103 = vmatpush1.msra.mxu0 %v1021
        %1104 = vmatprep.subr.mxu0 0.0
        %1105 = vmatpush1.msra.mxu0 0.0
        %1106 = vmatprep.subr.mxu0 0.0
        %1107 = vmatpush1.msra.mxu0 0.0
        %1108 = vmatprep.subr.mxu0 0.0
        %1109 = vmatpush1.msra.mxu0 0.0
        %1110 = vmatprep.subr.mxu0 0.0
        %1111 = vmatpush1.msra.mxu0 0.0
        %1112 = vmatprep.subr.mxu0 0.0
        %1113 = vmatpush1.msra.mxu0 0.0
        %1114 = vmatprep.subr.mxu0 0.0
        %1115 = vmatpush1.msra.mxu0 0.0
        %1116 = vmatprep.subr.mxu0 0.0
        %1117 = vmatpush1.msra.mxu0 0.0
        %1118 = vmatprep.subr.mxu0 0.0
        %1119 = vmatpush1.msra.mxu0 0.0
        %1120 = vmatprep.subr.mxu0 0.0
        %1121 = vmatpush1.msra.mxu0 0.0
        %1122 = vmatprep.subr.mxu0 0.0
        %1123 = vmatpush1.msra.mxu0 0.0
        %1124 = vmatprep.subr.mxu0 0.0
        %1125 = vmatpush1.msra.mxu0 0.0
        %1126 = vmatprep.subr.mxu0 0.0
        %1127 = vmatpush1.msra.mxu0 0.0
        %1128 = vmatprep.subr.mxu0 0.0
        %1129 = vmatpush1.msra.mxu0 0.0
        %1130 = vmatprep.subr.mxu0 0.0
        %1131 = vmatpush1.msra.mxu0 0.0
        %1132 = vmatprep.subr.mxu0 0.0
        %1133 = vmatpush1.msra.mxu0 0.0
        %1134 = vmatprep.subr.mxu0 0.0
        %1135 = vmatpush1.msra.mxu0 0.0
        %1136 = vmatprep.subr.mxu0 0.0
        %1137 = vmatpush1.msra.mxu0 0.0
        %1138 = vmatprep.subr.mxu0 0.0
        %1139 = vmatpush1.msra.mxu0 0.0
        %1140 = vmatprep.subr.mxu0 0.0
        %1141 = vmatpush1.msra.mxu0 0.0
        %1142 = vmatprep.subr.mxu0 0.0
        %1143 = vmatpush1.msra.mxu0 0.0
        %1144 = vmatprep.subr.mxu0 0.0
        %1145 = vmatpush1.msra.mxu0 0.0
        %1146 = vmatprep.subr.mxu0 0.0
        %1147 = vmatpush1.msra.mxu0 0.0
        %1148 = vmatprep.subr.mxu0 0.0
        %1149 = vmatpush1.msra.mxu0 0.0
        %1150 = vmatprep.subr.mxu0 0.0
        %1151 = vmatpush1.msra.mxu0 0.0
        %1152 = vmatprep.subr.mxu0 0.0
        %1153 = vmatpush1.msra.mxu0 0.0
        %1154 = vmatprep.subr.mxu0 0.0
        %1155 = vmatpush1.msra.mxu0 0.0
        %1156 = vmatprep.subr.mxu0 0.0
        %1157 = vmatpush1.msra.mxu0 0.0
        %1158 = vmatprep.subr.mxu0 0.0
        %1159 = vmatpush1.msra.mxu0 0.0
        %1160 = vmatprep.subr.mxu0 0.0
        %1161 = vmatpush1.msra.mxu0 0.0
        %1162 = vmatprep.subr.mxu0 0.0
        %1163 = vmatpush1.msra.mxu0 0.0
        %1164 = vmatprep.subr.mxu0 0.0
        %1165 = vmatpush1.msra.mxu0 0.0
        %1166 = vmatprep.mubr.f32.mxu0 0.0
        %1167 = vmatmul.mubr.f32.gmra.mrb[0].mxu0 %v1100
        %v1168 = vpop.f32.mrb[0].mxu0
        %v1169 = vadd.f32 %v1095, %v1168
        %v1170 = vpop.f32.mrb[0].mxu0
        %v1171 = vadd.f32 %v1097, %v1170
        %1172 = vdwg.mxu0
        %v1174 = vsel %vm259, %v215, 0
        %1176 = vmatprep.subr.mxu0 %v1024
        %1177 = vmatpush1.msra.mxu0 %v1023
        %1178 = vmatprep.subr.mxu0 0.0
        %1179 = vmatpush1.msra.mxu0 0.0
        %1180 = vmatprep.subr.mxu0 0.0
        %1181 = vmatpush1.msra.mxu0 0.0
        %1182 = vmatprep.subr.mxu0 0.0
        %1183 = vmatpush1.msra.mxu0 0.0
        %1184 = vmatprep.subr.mxu0 0.0
        %1185 = vmatpush1.msra.mxu0 0.0
        %1186 = vmatprep.subr.mxu0 0.0
        %1187 = vmatpush1.msra.mxu0 0.0
        %1188 = vmatprep.subr.mxu0 0.0
        %1189 = vmatpush1.msra.mxu0 0.0
        %1190 = vmatprep.subr.mxu0 0.0
        %1191 = vmatpush1.msra.mxu0 0.0
        %1192 = vmatprep.subr.mxu0 0.0
        %1193 = vmatpush1.msra.mxu0 0.0
        %1194 = vmatprep.subr.mxu0 0.0
        %1195 = vmatpush1.msra.mxu0 0.0
        %1196 = vmatprep.subr.mxu0 0.0
        %1197 = vmatpush1.msra.mxu0 0.0
        %1198 = vmatprep.subr.mxu0 0.0
        %1199 = vmatpush1.msra.mxu0 0.0
        %1200 = vmatprep.subr.mxu0 0.0
        %1201 = vmatpush1.msra.mxu0 0.0
        %1202 = vmatprep.subr.mxu0 0.0
        %1203 = vmatpush1.msra.mxu0 0.0
        %1204 = vmatprep.subr.mxu0 0.0
        %1205 = vmatpush1.msra.mxu0 0.0
        %1206 = vmatprep.subr.mxu0 0.0
        %1207 = vmatpush1.msra.mxu0 0.0
        %1208 = vmatprep.subr.mxu0 0.0
        %1209 = vmatpush1.msra.mxu0 0.0
        %1210 = vmatprep.subr.mxu0 0.0
        %1211 = vmatpush1.msra.mxu0 0.0
        %1212 = vmatprep.subr.mxu0 0.0
        %1213 = vmatpush1.msra.mxu0 0.0
        %1214 = vmatprep.subr.mxu0 0.0
        %1215 = vmatpush1.msra.mxu0 0.0
        %1216 = vmatprep.subr.mxu0 0.0
        %1217 = vmatpush1.msra.mxu0 0.0
        %1218 = vmatprep.subr.mxu0 0.0
        %1219 = vmatpush1.msra.mxu0 0.0
        %1220 = vmatprep.subr.mxu0 0.0
        %1221 = vmatpush1.msra.mxu0 0.0
        %1222 = vmatprep.subr.mxu0 0.0
        %1223 = vmatpush1.msra.mxu0 0.0
        %1224 = vmatprep.subr.mxu0 0.0
        %1225 = vmatpush1.msra.mxu0 0.0
        %1226 = vmatprep.subr.mxu0 0.0
        %1227 = vmatpush1.msra.mxu0 0.0
        %1228 = vmatprep.subr.mxu0 0.0
        %1229 = vmatpush1.msra.mxu0 0.0
        %1230 = vmatprep.subr.mxu0 0.0
        %1231 = vmatpush1.msra.mxu0 0.0
        %1232 = vmatprep.subr.mxu0 0.0
        %1233 = vmatpush1.msra.mxu0 0.0
        %1234 = vmatprep.subr.mxu0 0.0
        %1235 = vmatpush1.msra.mxu0 0.0
        %1236 = vmatprep.subr.mxu0 0.0
        %1237 = vmatpush1.msra.mxu0 0.0
        %1238 = vmatprep.subr.mxu0 0.0
        %1239 = vmatpush1.msra.mxu0 0.0
        %1240 = vmatprep.mubr.f32.mxu0 0.0
        %1241 = vmatmul.mubr.f32.gmra.mrb[0].mxu0 %v1174
        %v1242 = vpop.f32.mrb[0].mxu0
        %v1243 = vadd.f32 0.0, %v1242
        %v1244 = vpop.f32.mrb[0].mxu0
        %v1245 = vadd.f32 0.0, %v1244
        %1246 = vdwg.mxu0
        %v1247 = vadd.f32 %v1169, %v1243
        %v1248 = vadd.f32 %v1171, %v1245
        %1249 = vrot.lane.b32.xlu0 %v991, 1
        %v1250 = vpop.permute.xlu0 %1249
        %1251 = vrot.lane.b32.xlu0 %v992, 1
        %v1252 = vpop.permute.xlu0 %1251
        %v1253 = vsel %vm245, %v1250, %v1252
        %v1254 = vsel %vm245, %v1252, %v1250
        %1255 = vrot.lane.b32.xlu0 %v991, 127
        %v1256 = vpop.permute.xlu0 %1255
        %1257 = vrot.lane.b32.xlu0 %v992, 127
        %v1258 = vpop.permute.xlu0 %1257
        %v1259 = vsel %vm252, %v1256, %v1258
        %v1260 = vsel %vm252, %v1258, %v1256
        %v1261 = vsel %vm200, %v1259, %v1254
        %v1262 = vsel %vm201, %v1260, %v1253
        %v1263 = vsel %vm202, %v1254, %v1259
        %v1264 = vsel %vm203, %v1253, %v1260
        %v1266 = vsel %vm259, %v216, 0
        %1268 = vmatprep.subr.mxu0 %v1262
        %1269 = vmatpush1.msra.mxu0 %v1261
        %1270 = vmatprep.subr.mxu0 0.0
        %1271 = vmatpush1.msra.mxu0 0.0
        %1272 = vmatprep.subr.mxu0 0.0
        %1273 = vmatpush1.msra.mxu0 0.0
        %1274 = vmatprep.subr.mxu0 0.0
        %1275 = vmatpush1.msra.mxu0 0.0
        %1276 = vmatprep.subr.mxu0 0.0
        %1277 = vmatpush1.msra.mxu0 0.0
        %1278 = vmatprep.subr.mxu0 0.0
        %1279 = vmatpush1.msra.mxu0 0.0
        %1280 = vmatprep.subr.mxu0 0.0
        %1281 = vmatpush1.msra.mxu0 0.0
        %1282 = vmatprep.subr.mxu0 0.0
        %1283 = vmatpush1.msra.mxu0 0.0
        %1284 = vmatprep.subr.mxu0 0.0
        %1285 = vmatpush1.msra.mxu0 0.0
        %1286 = vmatprep.subr.mxu0 0.0
        %1287 = vmatpush1.msra.mxu0 0.0
        %1288 = vmatprep.subr.mxu0 0.0
        %1289 = vmatpush1.msra.mxu0 0.0
        %1290 = vmatprep.subr.mxu0 0.0
        %1291 = vmatpush1.msra.mxu0 0.0
        %1292 = vmatprep.subr.mxu0 0.0
        %1293 = vmatpush1.msra.mxu0 0.0
        %1294 = vmatprep.subr.mxu0 0.0
        %1295 = vmatpush1.msra.mxu0 0.0
        %1296 = vmatprep.subr.mxu0 0.0
        %1297 = vmatpush1.msra.mxu0 0.0
        %1298 = vmatprep.subr.mxu0 0.0
        %1299 = vmatpush1.msra.mxu0 0.0
        %1300 = vmatprep.subr.mxu0 0.0
        %1301 = vmatpush1.msra.mxu0 0.0
        %1302 = vmatprep.subr.mxu0 0.0
        %1303 = vmatpush1.msra.mxu0 0.0
        %1304 = vmatprep.subr.mxu0 0.0
        %1305 = vmatpush1.msra.mxu0 0.0
        %1306 = vmatprep.subr.mxu0 0.0
        %1307 = vmatpush1.msra.mxu0 0.0
        %1308 = vmatprep.subr.mxu0 0.0
        %1309 = vmatpush1.msra.mxu0 0.0
        %1310 = vmatprep.subr.mxu0 0.0
        %1311 = vmatpush1.msra.mxu0 0.0
        %1312 = vmatprep.subr.mxu0 0.0
        %1313 = vmatpush1.msra.mxu0 0.0
        %1314 = vmatprep.subr.mxu0 0.0
        %1315 = vmatpush1.msra.mxu0 0.0
        %1316 = vmatprep.subr.mxu0 0.0
        %1317 = vmatpush1.msra.mxu0 0.0
        %1318 = vmatprep.subr.mxu0 0.0
        %1319 = vmatpush1.msra.mxu0 0.0
        %1320 = vmatprep.subr.mxu0 0.0
        %1321 = vmatpush1.msra.mxu0 0.0
        %1322 = vmatprep.subr.mxu0 0.0
        %1323 = vmatpush1.msra.mxu0 0.0
        %1324 = vmatprep.subr.mxu0 0.0
        %1325 = vmatpush1.msra.mxu0 0.0
        %1326 = vmatprep.subr.mxu0 0.0
        %1327 = vmatpush1.msra.mxu0 0.0
        %1328 = vmatprep.subr.mxu0 0.0
        %1329 = vmatpush1.msra.mxu0 0.0
        %1330 = vmatprep.subr.mxu0 0.0
        %1331 = vmatpush1.msra.mxu0 0.0
        %1332 = vmatprep.mubr.f32.mxu0 0.0
        %1333 = vmatmul.mubr.f32.gmra.mrb[0].mxu0 %v1266
        %v1334 = vpop.f32.mrb[0].mxu0
        %v1335 = vadd.f32 0.0, %v1334
        %v1336 = vpop.f32.mrb[0].mxu0
        %v1337 = vadd.f32 0.0, %v1336
        %1338 = vdwg.mxu0
        %v1339 = vadd.f32 %v1247, %v1335
        %v1340 = vadd.f32 %v1248, %v1337
        %v1342 = vsel %vm259, %v217, 0
        %1344 = vmatprep.subr.mxu0 %v992
        %1345 = vmatpush1.msra.mxu0 %v991
        %1346 = vmatprep.subr.mxu0 0.0
        %1347 = vmatpush1.msra.mxu0 0.0
        %1348 = vmatprep.subr.mxu0 0.0
        %1349 = vmatpush1.msra.mxu0 0.0
        %1350 = vmatprep.subr.mxu0 0.0
        %1351 = vmatpush1.msra.mxu0 0.0
        %1352 = vmatprep.subr.mxu0 0.0
        %1353 = vmatpush1.msra.mxu0 0.0
        %1354 = vmatprep.subr.mxu0 0.0
        %1355 = vmatpush1.msra.mxu0 0.0
        %1356 = vmatprep.subr.mxu0 0.0
        %1357 = vmatpush1.msra.mxu0 0.0
        %1358 = vmatprep.subr.mxu0 0.0
        %1359 = vmatpush1.msra.mxu0 0.0
        %1360 = vmatprep.subr.mxu0 0.0
        %1361 = vmatpush1.msra.mxu0 0.0
        %1362 = vmatprep.subr.mxu0 0.0
        %1363 = vmatpush1.msra.mxu0 0.0
        %1364 = vmatprep.subr.mxu0 0.0
        %1365 = vmatpush1.msra.mxu0 0.0
        %1366 = vmatprep.subr.mxu0 0.0
        %1367 = vmatpush1.msra.mxu0 0.0
        %1368 = vmatprep.subr.mxu0 0.0
        %1369 = vmatpush1.msra.mxu0 0.0
        %1370 = vmatprep.subr.mxu0 0.0
        %1371 = vmatpush1.msra.mxu0 0.0
        %1372 = vmatprep.subr.mxu0 0.0
        %1373 = vmatpush1.msra.mxu0 0.0
        %1374 = vmatprep.subr.mxu0 0.0
        %1375 = vmatpush1.msra.mxu0 0.0
        %1376 = vmatprep.subr.mxu0 0.0
        %1377 = vmatpush1.msra.mxu0 0.0
        %1378 = vmatprep.subr.mxu0 0.0
        %1379 = vmatpush1.msra.mxu0 0.0
        %1380 = vmatprep.subr.mxu0 0.0
        %1381 = vmatpush1.msra.mxu0 0.0
        %1382 = vmatprep.subr.mxu0 0.0
        %1383 = vmatpush1.msra.mxu0 0.0
        %1384 = vmatprep.subr.mxu0 0.0
        %1385 = vmatpush1.msra.mxu0 0.0
        %1386 = vmatprep.subr.mxu0 0.0
        %1387 = vmatpush1.msra.mxu0 0.0
        %1388 = vmatprep.subr.mxu0 0.0
        %1389 = vmatpush1.msra.mxu0 0.0
        %1390 = vmatprep.subr.mxu0 0.0
        %1391 = vmatpush1.msra.mxu0 0.0
        %1392 = vmatprep.subr.mxu0 0.0
        %1393 = vmatpush1.msra.mxu0 0.0
        %1394 = vmatprep.subr.mxu0 0.0
        %1395 = vmatpush1.msra.mxu0 0.0
        %1396 = vmatprep.subr.mxu0 0.0
        %1397 = vmatpush1.msra.mxu0 0.0
        %1398 = vmatprep.subr.mxu0 0.0
        %1399 = vmatpush1.msra.mxu0 0.0
        %1400 = vmatprep.subr.mxu0 0.0
        %1401 = vmatpush1.msra.mxu0 0.0
        %1402 = vmatprep.subr.mxu0 0.0
        %1403 = vmatpush1.msra.mxu0 0.0
        %1404 = vmatprep.subr.mxu0 0.0
        %1405 = vmatpush1.msra.mxu0 0.0
        %1406 = vmatprep.subr.mxu0 0.0
        %1407 = vmatpush1.msra.mxu0 0.0
        %1408 = vmatprep.mubr.f32.mxu0 0.0
        %1409 = vmatmul.mubr.f32.gmra.mrb[0].mxu0 %v1342
        %v1410 = vpop.f32.mrb[0].mxu0
        %v1411 = vadd.f32 0.0, %v1410
        %v1412 = vpop.f32.mrb[0].mxu0
        %v1413 = vadd.f32 0.0, %v1412
        %1414 = vdwg.mxu0
        %v1415 = vadd.f32 %v1339, %v1411
        %v1416 = vadd.f32 %v1340, %v1413
        %v1418 = vsel %vm259, %v218, 0
        %1420 = vmatprep.subr.mxu0 %v1264
        %1421 = vmatpush1.msra.mxu0 %v1263
        %1422 = vmatprep.subr.mxu0 0.0
        %1423 = vmatpush1.msra.mxu0 0.0
        %1424 = vmatprep.subr.mxu0 0.0
        %1425 = vmatpush1.msra.mxu0 0.0
        %1426 = vmatprep.subr.mxu0 0.0
        %1427 = vmatpush1.msra.mxu0 0.0
        %1428 = vmatprep.subr.mxu0 0.0
        %1429 = vmatpush1.msra.mxu0 0.0
        %1430 = vmatprep.subr.mxu0 0.0
        %1431 = vmatpush1.msra.mxu0 0.0
        %1432 = vmatprep.subr.mxu0 0.0
        %1433 = vmatpush1.msra.mxu0 0.0
        %1434 = vmatprep.subr.mxu0 0.0
        %1435 = vmatpush1.msra.mxu0 0.0
        %1436 = vmatprep.subr.mxu0 0.0
        %1437 = vmatpush1.msra.mxu0 0.0
        %1438 = vmatprep.subr.mxu0 0.0
        %1439 = vmatpush1.msra.mxu0 0.0
        %1440 = vmatprep.subr.mxu0 0.0
        %1441 = vmatpush1.msra.mxu0 0.0
        %1442 = vmatprep.subr.mxu0 0.0
        %1443 = vmatpush1.msra.mxu0 0.0
        %1444 = vmatprep.subr.mxu0 0.0
        %1445 = vmatpush1.msra.mxu0 0.0
        %1446 = vmatprep.subr.mxu0 0.0
        %1447 = vmatpush1.msra.mxu0 0.0
        %1448 = vmatprep.subr.mxu0 0.0
        %1449 = vmatpush1.msra.mxu0 0.0
        %1450 = vmatprep.subr.mxu0 0.0
        %1451 = vmatpush1.msra.mxu0 0.0
        %1452 = vmatprep.subr.mxu0 0.0
        %1453 = vmatpush1.msra.mxu0 0.0
        %1454 = vmatprep.subr.mxu0 0.0
        %1455 = vmatpush1.msra.mxu0 0.0
        %1456 = vmatprep.subr.mxu0 0.0
        %1457 = vmatpush1.msra.mxu0 0.0
        %1458 = vmatprep.subr.mxu0 0.0
        %1459 = vmatpush1.msra.mxu0 0.0
        %1460 = vmatprep.subr.mxu0 0.0
        %1461 = vmatpush1.msra.mxu0 0.0
        %1462 = vmatprep.subr.mxu0 0.0
        %1463 = vmatpush1.msra.mxu0 0.0
        %1464 = vmatprep.subr.mxu0 0.0
        %1465 = vmatpush1.msra.mxu0 0.0
        %1466 = vmatprep.subr.mxu0 0.0
        %1467 = vmatpush1.msra.mxu0 0.0
        %1468 = vmatprep.subr.mxu0 0.0
        %1469 = vmatpush1.msra.mxu0 0.0
        %1470 = vmatprep.subr.mxu0 0.0
        %1471 = vmatpush1.msra.mxu0 0.0
        %1472 = vmatprep.subr.mxu0 0.0
        %1473 = vmatpush1.msra.mxu0 0.0
        %1474 = vmatprep.subr.mxu0 0.0
        %1475 = vmatpush1.msra.mxu0 0.0
        %1476 = vmatprep.subr.mxu0 0.0
        %1477 = vmatpush1.msra.mxu0 0.0
        %1478 = vmatprep.subr.mxu0 0.0
        %1479 = vmatpush1.msra.mxu0 0.0
        %1480 = vmatprep.subr.mxu0 0.0
        %1481 = vmatpush1.msra.mxu0 0.0
        %1482 = vmatprep.subr.mxu0 0.0
        %1483 = vmatpush1.msra.mxu0 0.0
        %1484 = vmatprep.mubr.f32.mxu0 0.0
        %1485 = vmatmul.mubr.f32.gmra.mrb[0].mxu0 %v1418
        %v1486 = vpop.f32.mrb[0].mxu0
        %v1487 = vadd.f32 0.0, %v1486
        %v1488 = vpop.f32.mrb[0].mxu0
        %v1489 = vadd.f32 0.0, %v1488
        %1490 = vdwg.mxu0
        %v1491 = vadd.f32 %v1415, %v1487
        %v1492 = vadd.f32 %v1416, %v1489
        %1493 = vrot.lane.b32.xlu0 %v1007, 1
        %v1494 = vpop.permute.xlu0 %1493
        %1495 = vrot.lane.b32.xlu0 %v1008, 1
        %v1496 = vpop.permute.xlu0 %1495
        %v1497 = vsel %vm245, %v1494, %v1496
        %v1498 = vsel %vm245, %v1496, %v1494
        %1499 = vrot.lane.b32.xlu0 %v1007, 127
        %v1500 = vpop.permute.xlu0 %1499
        %1501 = vrot.lane.b32.xlu0 %v1008, 127
        %v1502 = vpop.permute.xlu0 %1501
        %v1503 = vsel %vm252, %v1500, %v1502
        %v1504 = vsel %vm252, %v1502, %v1500
        %v1505 = vsel %vm200, %v1503, %v1498
        %v1506 = vsel %vm201, %v1504, %v1497
        %v1507 = vsel %vm202, %v1498, %v1503
        %v1508 = vsel %vm203, %v1497, %v1504
        %v1510 = vsel %vm259, %v219, 0
        %1512 = vmatprep.subr.mxu0 %v1506
        %1513 = vmatpush1.msra.mxu0 %v1505
        %1514 = vmatprep.subr.mxu0 0.0
        %1515 = vmatpush1.msra.mxu0 0.0
        %1516 = vmatprep.subr.mxu0 0.0
        %1517 = vmatpush1.msra.mxu0 0.0
        %1518 = vmatprep.subr.mxu0 0.0
        %1519 = vmatpush1.msra.mxu0 0.0
        %1520 = vmatprep.subr.mxu0 0.0
        %1521 = vmatpush1.msra.mxu0 0.0
        %1522 = vmatprep.subr.mxu0 0.0
        %1523 = vmatpush1.msra.mxu0 0.0
        %1524 = vmatprep.subr.mxu0 0.0
        %1525 = vmatpush1.msra.mxu0 0.0
        %1526 = vmatprep.subr.mxu0 0.0
        %1527 = vmatpush1.msra.mxu0 0.0
        %1528 = vmatprep.subr.mxu0 0.0
        %1529 = vmatpush1.msra.mxu0 0.0
        %1530 = vmatprep.subr.mxu0 0.0
        %1531 = vmatpush1.msra.mxu0 0.0
        %1532 = vmatprep.subr.mxu0 0.0
        %1533 = vmatpush1.msra.mxu0 0.0
        %1534 = vmatprep.subr.mxu0 0.0
        %1535 = vmatpush1.msra.mxu0 0.0
        %1536 = vmatprep.subr.mxu0 0.0
        %1537 = vmatpush1.msra.mxu0 0.0
        %1538 = vmatprep.subr.mxu0 0.0
        %1539 = vmatpush1.msra.mxu0 0.0
        %1540 = vmatprep.subr.mxu0 0.0
        %1541 = vmatpush1.msra.mxu0 0.0
        %1542 = vmatprep.subr.mxu0 0.0
        %1543 = vmatpush1.msra.mxu0 0.0
        %1544 = vmatprep.subr.mxu0 0.0
        %1545 = vmatpush1.msra.mxu0 0.0
        %1546 = vmatprep.subr.mxu0 0.0
        %1547 = vmatpush1.msra.mxu0 0.0
        %1548 = vmatprep.subr.mxu0 0.0
        %1549 = vmatpush1.msra.mxu0 0.0
        %1550 = vmatprep.subr.mxu0 0.0
        %1551 = vmatpush1.msra.mxu0 0.0
        %1552 = vmatprep.subr.mxu0 0.0
        %1553 = vmatpush1.msra.mxu0 0.0
        %1554 = vmatprep.subr.mxu0 0.0
        %1555 = vmatpush1.msra.mxu0 0.0
        %1556 = vmatprep.subr.mxu0 0.0
        %1557 = vmatpush1.msra.mxu0 0.0
        %1558 = vmatprep.subr.mxu0 0.0
        %1559 = vmatpush1.msra.mxu0 0.0
        %1560 = vmatprep.subr.mxu0 0.0
        %1561 = vmatpush1.msra.mxu0 0.0
        %1562 = vmatprep.subr.mxu0 0.0
        %1563 = vmatpush1.msra.mxu0 0.0
        %1564 = vmatprep.subr.mxu0 0.0
        %1565 = vmatpush1.msra.mxu0 0.0
        %1566 = vmatprep.subr.mxu0 0.0
        %1567 = vmatpush1.msra.mxu0 0.0
        %1568 = vmatprep.subr.mxu0 0.0
        %1569 = vmatpush1.msra.mxu0 0.0
        %1570 = vmatprep.subr.mxu0 0.0
        %1571 = vmatpush1.msra.mxu0 0.0
        %1572 = vmatprep.subr.mxu0 0.0
        %1573 = vmatpush1.msra.mxu0 0.0
        %1574 = vmatprep.subr.mxu0 0.0
        %1575 = vmatpush1.msra.mxu0 0.0
        %1576 = vmatprep.mubr.f32.mxu0 0.0
        %1577 = vmatmul.mubr.f32.gmra.mrb[0].mxu0 %v1510
        %v1578 = vpop.f32.mrb[0].mxu0
        %v1579 = vadd.f32 0.0, %v1578
        %v1580 = vpop.f32.mrb[0].mxu0
        %v1581 = vadd.f32 0.0, %v1580
        %1582 = vdwg.mxu0
        %v1583 = vadd.f32 %v1491, %v1579
        %v1584 = vadd.f32 %v1492, %v1581
        %v1586 = vsel %vm259, %v220, 0
        %1588 = vmatprep.subr.mxu0 %v1008
        %1589 = vmatpush1.msra.mxu0 %v1007
        %1590 = vmatprep.subr.mxu0 0.0
        %1591 = vmatpush1.msra.mxu0 0.0
        %1592 = vmatprep.subr.mxu0 0.0
        %1593 = vmatpush1.msra.mxu0 0.0
        %1594 = vmatprep.subr.mxu0 0.0
        %1595 = vmatpush1.msra.mxu0 0.0
        %1596 = vmatprep.subr.mxu0 0.0
        %1597 = vmatpush1.msra.mxu0 0.0
        %1598 = vmatprep.subr.mxu0 0.0
        %1599 = vmatpush1.msra.mxu0 0.0
        %1600 = vmatprep.subr.mxu0 0.0
        %1601 = vmatpush1.msra.mxu0 0.0
        %1602 = vmatprep.subr.mxu0 0.0
        %1603 = vmatpush1.msra.mxu0 0.0
        %1604 = vmatprep.subr.mxu0 0.0
        %1605 = vmatpush1.msra.mxu0 0.0
        %1606 = vmatprep.subr.mxu0 0.0
        %1607 = vmatpush1.msra.mxu0 0.0
        %1608 = vmatprep.subr.mxu0 0.0
        %1609 = vmatpush1.msra.mxu0 0.0
        %1610 = vmatprep.subr.mxu0 0.0
        %1611 = vmatpush1.msra.mxu0 0.0
        %1612 = vmatprep.subr.mxu0 0.0
        %1613 = vmatpush1.msra.mxu0 0.0
        %1614 = vmatprep.subr.mxu0 0.0
        %1615 = vmatpush1.msra.mxu0 0.0
        %1616 = vmatprep.subr.mxu0 0.0
        %1617 = vmatpush1.msra.mxu0 0.0
        %1618 = vmatprep.subr.mxu0 0.0
        %1619 = vmatpush1.msra.mxu0 0.0
        %1620 = vmatprep.subr.mxu0 0.0
        %1621 = vmatpush1.msra.mxu0 0.0
        %1622 = vmatprep.subr.mxu0 0.0
        %1623 = vmatpush1.msra.mxu0 0.0
        %1624 = vmatprep.subr.mxu0 0.0
        %1625 = vmatpush1.msra.mxu0 0.0
        %1626 = vmatprep.subr.mxu0 0.0
        %1627 = vmatpush1.msra.mxu0 0.0
        %1628 = vmatprep.subr.mxu0 0.0
        %1629 = vmatpush1.msra.mxu0 0.0
        %1630 = vmatprep.subr.mxu0 0.0
        %1631 = vmatpush1.msra.mxu0 0.0
        %1632 = vmatprep.subr.mxu0 0.0
        %1633 = vmatpush1.msra.mxu0 0.0
        %1634 = vmatprep.subr.mxu0 0.0
        %1635 = vmatpush1.msra.mxu0 0.0
        %1636 = vmatprep.subr.mxu0 0.0
        %1637 = vmatpush1.msra.mxu0 0.0
        %1638 = vmatprep.subr.mxu0 0.0
        %1639 = vmatpush1.msra.mxu0 0.0
        %1640 = vmatprep.subr.mxu0 0.0
        %1641 = vmatpush1.msra.mxu0 0.0
        %1642 = vmatprep.subr.mxu0 0.0
        %1643 = vmatpush1.msra.mxu0 0.0
        %1644 = vmatprep.subr.mxu0 0.0
        %1645 = vmatpush1.msra.mxu0 0.0
        %1646 = vmatprep.subr.mxu0 0.0
        %1647 = vmatpush1.msra.mxu0 0.0
        %1648 = vmatprep.subr.mxu0 0.0
        %1649 = vmatpush1.msra.mxu0 0.0
        %1650 = vmatprep.subr.mxu0 0.0
        %1651 = vmatpush1.msra.mxu0 0.0
        %1652 = vmatprep.mubr.f32.mxu0 0.0
        %1653 = vmatmul.mubr.f32.gmra.mrb[0].mxu0 %v1586
        %v1654 = vpop.f32.mrb[0].mxu0
        %v1655 = vadd.f32 0.0, %v1654
        %v1656 = vpop.f32.mrb[0].mxu0
        %v1657 = vadd.f32 0.0, %v1656
        %1658 = vdwg.mxu0
        %v1659 = vadd.f32 %v1583, %v1655
        %v1660 = vadd.f32 %v1584, %v1657
        %v1662 = vsel %vm259, %v221, 0
        %1664 = vmatprep.subr.mxu0 %v1508
        %1665 = vmatpush1.msra.mxu0 %v1507
        %1666 = vmatprep.subr.mxu0 0.0
        %1667 = vmatpush1.msra.mxu0 0.0
        %1668 = vmatprep.subr.mxu0 0.0
        %1669 = vmatpush1.msra.mxu0 0.0
        %1670 = vmatprep.subr.mxu0 0.0
        %1671 = vmatpush1.msra.mxu0 0.0
        %1672 = vmatprep.subr.mxu0 0.0
        %1673 = vmatpush1.msra.mxu0 0.0
        %1674 = vmatprep.subr.mxu0 0.0
        %1675 = vmatpush1.msra.mxu0 0.0
        %1676 = vmatprep.subr.mxu0 0.0
        %1677 = vmatpush1.msra.mxu0 0.0
        %1678 = vmatprep.subr.mxu0 0.0
        %1679 = vmatpush1.msra.mxu0 0.0
        %1680 = vmatprep.subr.mxu0 0.0
        %1681 = vmatpush1.msra.mxu0 0.0
        %1682 = vmatprep.subr.mxu0 0.0
        %1683 = vmatpush1.msra.mxu0 0.0
        %1684 = vmatprep.subr.mxu0 0.0
        %1685 = vmatpush1.msra.mxu0 0.0
        %1686 = vmatprep.subr.mxu0 0.0
        %1687 = vmatpush1.msra.mxu0 0.0
        %1688 = vmatprep.subr.mxu0 0.0
        %1689 = vmatpush1.msra.mxu0 0.0
        %1690 = vmatprep.subr.mxu0 0.0
        %1691 = vmatpush1.msra.mxu0 0.0
        %1692 = vmatprep.subr.mxu0 0.0
        %1693 = vmatpush1.msra.mxu0 0.0
        %1694 = vmatprep.subr.mxu0 0.0
        %1695 = vmatpush1.msra.mxu0 0.0
        %1696 = vmatprep.subr.mxu0 0.0
        %1697 = vmatpush1.msra.mxu0 0.0
        %1698 = vmatprep.subr.mxu0 0.0
        %1699 = vmatpush1.msra.mxu0 0.0
        %1700 = vmatprep.subr.mxu0 0.0
        %1701 = vmatpush1.msra.mxu0 0.0
        %1702 = vmatprep.subr.mxu0 0.0
        %1703 = vmatpush1.msra.mxu0 0.0
        %1704 = vmatprep.subr.mxu0 0.0
        %1705 = vmatpush1.msra.mxu0 0.0
        %1706 = vmatprep.subr.mxu0 0.0
        %1707 = vmatpush1.msra.mxu0 0.0
        %1708 = vmatprep.subr.mxu0 0.0
        %1709 = vmatpush1.msra.mxu0 0.0
        %1710 = vmatprep.subr.mxu0 0.0
        %1711 = vmatpush1.msra.mxu0 0.0
        %1712 = vmatprep.subr.mxu0 0.0
        %1713 = vmatpush1.msra.mxu0 0.0
        %1714 = vmatprep.subr.mxu0 0.0
        %1715 = vmatpush1.msra.mxu0 0.0
        %1716 = vmatprep.subr.mxu0 0.0
        %1717 = vmatpush1.msra.mxu0 0.0
        %1718 = vmatprep.subr.mxu0 0.0
        %1719 = vmatpush1.msra.mxu0 0.0
        %1720 = vmatprep.subr.mxu0 0.0
        %1721 = vmatpush1.msra.mxu0 0.0
        %1722 = vmatprep.subr.mxu0 0.0
        %1723 = vmatpush1.msra.mxu0 0.0
        %1724 = vmatprep.subr.mxu0 0.0
        %1725 = vmatpush1.msra.mxu0 0.0
        %1726 = vmatprep.subr.mxu0 0.0
        %1727 = vmatpush1.msra.mxu0 0.0
        %1728 = vmatprep.mubr.f32.mxu0 0.0
        %1729 = vmatmul.mubr.f32.gmra.mrb[0].mxu0 %v1662
        %v1730 = vpop.f32.mrb[0].mxu0
        %v1731 = vadd.f32 0.0, %v1730
        %v1732 = vpop.f32.mrb[0].mxu0
        %v1733 = vadd.f32 0.0, %v1732
        %1734 = vdwg.mxu0
        %v1735 = vadd.f32 %v1659, %v1731
        %v1736 = vadd.f32 %v1660, %v1733
        %v1737 = vadd.f32 %v1735, %v1736
        %1738 = vadd.xlane.f32.xlu0 %v1737
        %v1739 = vpop.xlane.xlu0 %1738
        %v1740 = vmul.f32 %v1735, %v1735
        %v1741 = vmul.f32 %v1736, %v1736
        %v1742 = vadd.f32 %v1740, %v1741
        %1743 = vadd.xlane.f32.xlu0 %v1742
        %v1744 = vpop.xlane.xlu0 %1743
        %v1745 = vmul.f32 %v1739, 0.00390625
        %v1746 = vmul.f32 %v1744, 0.00390625
        %v1747 = vmul.f32 %v1745, %v1745
        %v1748 = vsub.f32 %v1746, %v1747
        %v1749 = vmax.f32 %v1748, 0.0
        %v1750 = vsub.f32 %v1735, %v1745
        %v1751 = vsub.f32 %v1736, %v1745
        %v1752 = vadd.f32 %v1749, 1e-05
        %v1753 = vrsqrt.pop %v1752
        %v1754 = vmul.f32 %v1750, %v1753
        %v1755 = vmul.f32 %v1751, %v1753
        %v1756 = vadd.f32 %v222, %v1754
        %v1757 = vadd.f32 %v223, %v1755
        %v1758 = vmax.f32 %v1756, 0.0
        %v1759 = vmax.f32 %v1757, 0.0
        %1760 = vst [vmem:[%s163] sm:$0xff] %v1758
        %1761 = vst [vmem:[%s163 + $0x8] sm:$0xff] %v1759
        %s1762 = sand.u32 %s93, 1
        %s1763 = scalar_lea.sflag [#allocation3], %s1762
        %s1764 = sand.u32 %s93, 1
        %s1765 = smul.addr %s1764, 16
        %s1766 = scalar_lea.vmem [#allocation2], %s1765
        // Predicated region
        $region33: #{tpu_custom_call.1} parent=31 // pred_check
          %p1767 = pneg %p103
        $region34: #{tpu_custom_call.1} parent=31 // pred_check_branch
          %1769 = sbr.rel (%p1767) target = $region36
        $region35: #{tpu_custom_call.1} parent=31 // pred_region
          %s1771 = ssub.s32 256, 256
          %1772 = vsyncadd %s1763, %s1771
          %s1773 = smul.addr %s17, 2
          %s1774 = smul.addr %s1773, 128
          %s1775 = scalar_lea.hbm %s3, %s1774
          %s1777 = sshll.u32 %s1766, 4
          %s1778 = int_to_ptr.vmem [resolvable:$true] %s1777
          %1780 = dma.vmem_to_hbm [thread:$0]  %s1778, 256, %s1775, %s1763
        $region36: #{tpu_custom_call.1} parent=31 // pred_fallthru
          _
      $region32: #{tpu_custom_call.1} parent=5 // pred_fallthru
        _
      %p1781 = scmp.le.s32.totalorder 2, %s12
      // Predicated region
      $region37: #{tpu_custom_call.1} parent=5 // pred_check
        %p1782 = pneg %p1781
      $region38: #{tpu_custom_call.1} parent=5 // pred_check_branch
        %1784 = sbr.rel (%p1782) target = $region40
      $region39: #{tpu_custom_call.1} parent=5 // pred_region
        %s1785 = ssub.s32 %s12, 2
        // Predicated region
        $region41: #{tpu_custom_call.1} parent=39 // pred_check
          %p1786 = pneg %p109
        $region42: #{tpu_custom_call.1} parent=39 // pred_check_branch
          %1788 = sbr.rel (%p1786) target = $region44
        $region43: #{tpu_custom_call.1} parent=39 // pred_region
          %s1789 = sand.u32 %s94, 1
          %s1790 = scalar_lea.sflag [#allocation3], %s1789
          %s1791 = sand.u32 %s94, 1
          %s1792 = smul.addr %s1791, 16
          %s1793 = scalar_lea.vmem [#allocation2], %s1792
          %1794 = dma.done %s1790, 256
        $region44: #{tpu_custom_call.1} parent=39 // pred_fallthru
          _
      $region40: #{tpu_custom_call.1} parent=5 // pred_fallthru
        _
    $region6: #{tpu_custom_call.1} parent=1 // loop_footer
      %s16 = sadd.s32 1, %s12
    $region7: #{tpu_custom_call.1} parent=1 // loop_footer_branch
      %11 = sbr.rel target = $region3
    $region8: #{tpu_custom_call.1} parent=1 // loop_exit
      _
    %1795 = vsyncpa [#allocation3], 1
    %s1796 = scalar_lea.sflag [#allocation3], 1
    %1797 = vsyncpa %s1796, 1

</llo_original>
